<compile_context>
chip_gen: v7x
topology: tpu7x:2x2x1
jax: 0.10.0
libtpu: 0.0.40
codegen_flags: <defaults>
</compile_context>

<pallas_src>
import numpy as np
import jax
import jax.numpy as jnp
from jax.experimental import pallas as pl
from jax.experimental.pallas import tpu as pltpu

H = W = 5
HW = H * W
CIN, CMID = 4, 16
FEAT = 9
IMG_IN = CIN * HW            # 100
IMG_IN_PAD = 128             # conv1 contraction dim padded to a lane-aligned K
IMG_OUT = CMID * HW          # 400
FDIM = IMG_OUT + FEAT        # 409
H1, H2, NOUT = 512, 256, 2
NOUT_PAD = 128               # lane-dense output width
EPS = 1e-5                   # PyTorch LayerNorm default eps


def _layernorm(x, g, b, n):
    """One-pass LayerNorm: var = E[x^2] - mu^2."""
    s = jnp.sum(x, axis=-1, keepdims=True)
    sq = jnp.sum(x * x, axis=-1, keepdims=True)
    mu = s * (1.0 / n)
    var = sq * (1.0 / n) - mu * mu
    return (x - mu) * jax.lax.rsqrt(var + EPS) * g + b


# --------------------- single fused forward kernel ---------------------------
def fused_kernel(ximg_ref, feat_ref,
                 wc1_ref, wc2_ref, w1i_ref, w1f_ref, w2_ref, w3_ref,
                 slab_ref, out_ref):
    f32, bf16 = jnp.float32, jnp.bfloat16

    # small-vector slab (biases / LN gamma,beta), packed host-side
    bc1 = slab_ref[0:1, :IMG_OUT]
    bc2 = slab_ref[1:2, :IMG_OUT]
    b1 = slab_ref[2:3, :]
    g1 = slab_ref[3:4, :]
    be1 = slab_ref[4:5, :]
    b2 = slab_ref[5:6, :H2]
    g2 = slab_ref[6:7, :H2]
    be2 = slab_ref[7:8, :H2]
    b3 = slab_ref[8:9, :NOUT_PAD]

    # ---- conv block: two unrolled-conv bf16 matmuls (Dropout2d = identity) ---
    x = ximg_ref[...]                                                    # (BT, 128) f32
    h = jnp.dot(x.astype(bf16), wc1_ref[...], preferred_element_type=f32) + bc1
    h = jnp.maximum(h, 0.0)                                              # ReLU
    xi = jnp.dot(h.astype(bf16), wc2_ref[...], preferred_element_type=f32) + bc2
    xi = jnp.maximum(xi, 0.0)                                            # (BT, 400) NCHW order
    ft = feat_ref[...]                                                   # (BT, 9)

    # ---- joint LayerNorm(409) over virtual concat [xi | ft] ----------------
    # gamma/beta are folded into fc1 host-side; one-pass statistics.
    s1 = jnp.sum(xi, axis=-1, keepdims=True) + jnp.sum(ft, axis=-1, keepdims=True)
    s2 = jnp.sum(xi * xi, axis=-1, keepdims=True) + jnp.sum(ft * ft, axis=-1, keepdims=True)
    mu = s1 * (1.0 / FDIM)
    var = s2 * (1.0 / FDIM) - mu * mu
    r = jax.lax.rsqrt(var + EPS)
    xi_c = (xi - mu) * r
    ft_c = (ft - mu) * r

    # ---- fc1 (row-split contraction, LN-folded weights) -> LN -> tanh ------
    h1 = (jnp.dot(xi_c.astype(bf16), w1i_ref[...], preferred_element_type=f32)
          + jnp.dot(ft_c, w1f_ref[...], preferred_element_type=f32) + b1)
    h1 = jnp.tanh(_layernorm(h1, g1, be1, H1))                           # (BT, 512)
    # ---- fc2 -> LN -> tanh --------------------------------------------------
    h2 = jnp.dot(h1.astype(bf16), w2_ref[...], preferred_element_type=f32) + b2
    h2 = jnp.tanh(_layernorm(h2, g2, be2, H2))                           # (BT, 256)
    # ---- fc3 (lane-padded to 128 output columns) ---------------------------
    out_ref[...] = jnp.dot(h2, w3_ref[...], preferred_element_type=f32) + b3


# --------------------- host-side parameter preparation -----------------------
def unroll_conv_matrix(w_oihw):
    """3x3 'same' conv on the fixed 5x5 grid as a dense (I*25, O*25) matrix.

    Row index = NCHW-flattened input (ci*25 + iy*5 + ix),
    col index = NCHW-flattened output (o*25 + y*5 + x).
    """
    w = np.asarray(w_oihw, np.float32)
    O, I, KH, KW = w.shape
    M = np.zeros((I * HW, O * HW), np.float32)
    for o in range(O):
        for ci in range(I):
            for y in range(H):
                for x in range(W):
                    for ky in range(KH):
                        for kx in range(KW):
                            iy, ix = y + ky - 1, x + kx - 1
                            if 0 <= iy < H and 0 <= ix < W:
                                M[ci * HW + iy * W + ix, o * HW + y * W + x] += w[o, ci, ky, kx]
    return M


def pack_params(p):
    """Unroll convs, fold LN(409) into fc1, pad fc3, pack small vectors."""
    npf = lambda a: np.asarray(a, np.float32)

    # unrolled conv matrices; conv1 contraction dim zero-padded 100 -> 128
    wc1 = np.zeros((IMG_IN_PAD, IMG_OUT), np.float32)
    wc1[:IMG_IN] = unroll_conv_matrix(p["conv1_w"])
    wc2 = unroll_conv_matrix(p["conv2_w"])                               # (400, 400)

    # fold LayerNorm(409) gamma/beta into fc1 (split at image/feature boundary)
    g, b = npf(p["ln_g"]), npf(p["ln_b"])
    W1 = npf(p["fc1_w"])                                                 # (409, 512)
    w1i = g[:IMG_OUT, None] * W1[:IMG_OUT]                               # (400, 512)
    w1f = g[IMG_OUT:, None] * W1[IMG_OUT:]                               # (9, 512)
    b1 = npf(p["fc1_b"]) + b[:IMG_OUT] @ W1[:IMG_OUT] + b[IMG_OUT:] @ W1[IMG_OUT:]

    # fc3 padded to a lane-dense 128-wide output
    w3 = np.zeros((H2, NOUT_PAD), np.float32)
    w3[:, :NOUT] = npf(p["fc3_w"])

    # all tiny (1, N) vectors packed into one slab -> single operand / DMA
    slab = np.zeros((16, H1), np.float32)
    slab[0, :IMG_OUT] = np.repeat(npf(p["conv1_b"]), HW)
    slab[1, :IMG_OUT] = np.repeat(npf(p["conv2_b"]), HW)
    slab[2, :H1] = b1
    slab[3, :H1] = npf(p["ln1_g"])
    slab[4, :H1] = npf(p["ln1_b"])
    slab[5, :H2] = npf(p["fc2_b"])
    slab[6, :H2] = npf(p["ln2_g"])
    slab[7, :H2] = npf(p["ln2_b"])
    slab[8, :NOUT] = npf(p["fc3_b"])

    bf16 = jnp.bfloat16
    return (jnp.asarray(wc1, bf16),            # (128, 400) bf16
            jnp.asarray(wc2, bf16),            # (400, 400) bf16
            jnp.asarray(w1i, bf16),            # (400, 512) bf16
            jnp.asarray(w1f),                  # (9, 512)   f32 (tiny K)
            jnp.asarray(npf(p["fc2_w"]), bf16),# (512, 256) bf16
            jnp.asarray(w3),                   # (256, 128) f32
            jnp.asarray(slab))                 # (16, 512)  f32


def _pick_batch_tile(B):
    # Keep tiles large (per-step overhead ~0.35us) but guarantee >= 2 grid
    # steps once B is big enough so the "parallel" grid axis can be sharded
    # across both TensorCores on v7x.
    for t in (512, 256, 128, 64, 32, 16, 8):
        if 2 * t <= B:
            return t
    return 8


def gamma_proton_forward(image, features, packed):
    B = image.shape[0]
    BT = _pick_batch_tile(B)
    Bp = pl.cdiv(B, BT) * BT                                  # pad batch to tile multiple

    ximg = image.reshape(B, IMG_IN).astype(jnp.float32)       # NCHW flatten == PyTorch .view
    ximg = jnp.pad(ximg, ((0, Bp - B), (0, IMG_IN_PAD - IMG_IN)))
    feat = jnp.pad(features.astype(jnp.float32), ((0, Bp - B), (0, 0)))

    def row(n):
        return pl.BlockSpec((BT, n), lambda i: (i, 0))

    def wt(a):
        return pl.BlockSpec(a.shape, lambda i: (0, 0))        # VMEM-resident across steps

    out = pl.pallas_call(
        fused_kernel,
        out_shape=jax.ShapeDtypeStruct((Bp, NOUT_PAD), jnp.float32),
        grid=(Bp // BT,),
        in_specs=[row(IMG_IN_PAD), row(FEAT)] + [wt(a) for a in packed],
        out_specs=row(NOUT_PAD),
        compiler_params=pltpu.CompilerParams(dimension_semantics=("parallel",)),
    )(ximg, feat, *packed)
    return out[:B, :NOUT]


# --------------------- parameter init + pure-JAX reference -------------------
def init_params(key):
    ks = jax.random.split(key, 16)
    rnd = lambda k, shape, s: jax.random.normal(k, shape, jnp.float32) * s
    p = {}
    p["conv1_w"] = rnd(ks[0], (CMID, CIN, 3, 3), 0.1)    # OIHW
    p["conv1_b"] = rnd(ks[1], (CMID,), 0.1)
    p["conv2_w"] = rnd(ks[2], (CMID, CMID, 3, 3), 0.1)
    p["conv2_b"] = rnd(ks[3], (CMID,), 0.1)
    p["ln_g"] = 1.0 + rnd(ks[4], (FDIM,), 0.05)
    p["ln_b"] = rnd(ks[5], (FDIM,), 0.05)
    p["fc1_w"] = rnd(ks[6], (FDIM, H1), 0.05)            # stored (in, out)
    p["fc1_b"] = rnd(ks[7], (H1,), 0.05)
    p["ln1_g"] = 1.0 + rnd(ks[8], (H1,), 0.05)
    p["ln1_b"] = rnd(ks[9], (H1,), 0.05)
    p["fc2_w"] = rnd(ks[10], (H1, H2), 0.05)
    p["fc2_b"] = rnd(ks[11], (H2,), 0.05)
    p["ln2_g"] = 1.0 + rnd(ks[12], (H2,), 0.05)
    p["ln2_b"] = rnd(ks[13], (H2,), 0.05)
    p["fc3_w"] = rnd(ks[14], (H2, NOUT), 0.05)
    p["fc3_b"] = rnd(ks[15], (NOUT,), 0.05)
    return p


def reference_forward(image, features, params):
    def conv(x, w, b):
        y = jax.lax.conv_general_dilated(x, w, (1, 1), ((1, 1), (1, 1)),
                                         dimension_numbers=("NCHW", "OIHW", "NCHW"))
        return jax.nn.relu(y + b[None, :, None, None])

    h = conv(conv(image, params["conv1_w"], params["conv1_b"]),
             params["conv2_w"], params["conv2_b"])
    x = jnp.concatenate([h.reshape(image.shape[0], -1), features], axis=1)

    def ln(v, g, b):
        mu = v.mean(-1, keepdims=True)
        var = ((v - mu) ** 2).mean(-1, keepdims=True)
        return (v - mu) / jnp.sqrt(var + EPS) * g + b

    x = ln(x, params["ln_g"], params["ln_b"])
    x = jnp.tanh(ln(x @ params["fc1_w"] + params["fc1_b"], params["ln1_g"], params["ln1_b"]))
    x = jnp.tanh(ln(x @ params["fc2_w"] + params["fc2_b"], params["ln2_g"], params["ln2_b"]))
    return x @ params["fc3_w"] + params["fc3_b"]


if __name__ == "__main__":
    key = jax.random.PRNGKey(0)
    kimg, kfeat, kparam = jax.random.split(key, 3)
    B = 2
    image = jax.random.normal(kimg, (B, CIN, H, W), jnp.float32)      # NCHW (2, 4, 5, 5)
    features = jax.random.normal(kfeat, (B, FEAT), jnp.float32)       # (2, 9)
    params = init_params(kparam)
    packed = pack_params(params)                                      # host-side, batch-independent

    out = gamma_proton_forward(image, features, packed)
    out = jax.block_until_ready(out)

    ref = reference_forward(image, features, params)
    assert out.shape == (B, NOUT)
    # Tolerance accounts for bf16 MXU operands (f32 accumulation) in the four
    # large matmuls; drop the bf16 casts to recover ~1e-5-level agreement.
    np.testing.assert_allclose(np.asarray(out), np.asarray(ref), atol=3e-2, rtol=3e-2)
    print("KERNEL_OK")
</pallas_src>

<mosaic_0001>
module attributes {stable_mosaic.version = 11 : i64} {
  func.func @fused_kernel(%arg0: i32, %arg1: memref<8x128xf32, #tpu.memory_space<vmem>>, %arg2: memref<8x9xf32, #tpu.memory_space<vmem>>, %arg3: memref<128x400xbf16, #tpu.memory_space<vmem>>, %arg4: memref<400x400xbf16, #tpu.memory_space<vmem>>, %arg5: memref<400x512xbf16, #tpu.memory_space<vmem>>, %arg6: memref<9x512xf32, #tpu.memory_space<vmem>>, %arg7: memref<512x256xbf16, #tpu.memory_space<vmem>>, %arg8: memref<256x128xf32, #tpu.memory_space<vmem>>, %arg9: memref<16x512xf32, #tpu.memory_space<vmem>>, %arg10: memref<8x128xf32, #tpu.memory_space<vmem>>) attributes {dimension_semantics = [#tpu.dimension_semantics<parallel>], iteration_bounds = array<i64: 1>, scalar_prefetch = 0 : i64, scratch_operands = 0 : i64, tpu.core_type = #tpu.core_type<tc>, window_params = [{transform_indices = @transform_0, window_bounds = array<i64: 8, 128>}, {transform_indices = @transform_1, window_bounds = array<i64: 8, 9>}, {pipeline_mode = #tpu.pipeline_mode<synchronous>, transform_indices = @transform_2, window_bounds = array<i64: 128, 400>}, {pipeline_mode = #tpu.pipeline_mode<synchronous>, transform_indices = @transform_3, window_bounds = array<i64: 400, 400>}, {pipeline_mode = #tpu.pipeline_mode<synchronous>, transform_indices = @transform_4, window_bounds = array<i64: 400, 512>}, {pipeline_mode = #tpu.pipeline_mode<synchronous>, transform_indices = @transform_5, window_bounds = array<i64: 9, 512>}, {pipeline_mode = #tpu.pipeline_mode<synchronous>, transform_indices = @transform_6, window_bounds = array<i64: 512, 256>}, {pipeline_mode = #tpu.pipeline_mode<synchronous>, transform_indices = @transform_7, window_bounds = array<i64: 256, 128>}, {pipeline_mode = #tpu.pipeline_mode<synchronous>, transform_indices = @transform_8, window_bounds = array<i64: 16, 512>}, {transform_indices = @transform_9, window_bounds = array<i64: 8, 128>}]} {
    %c0 = arith.constant 0 : index
    %c0_0 = arith.constant 0 : index
    %0 = vector.load %arg9[%c0, %c0_0] : memref<16x512xf32, #tpu.memory_space<vmem>>, vector<1x400xf32>
    %c1 = arith.constant 1 : index
    %c0_1 = arith.constant 0 : index
    %1 = vector.load %arg9[%c1, %c0_1] : memref<16x512xf32, #tpu.memory_space<vmem>>, vector<1x400xf32>
    %c2 = arith.constant 2 : index
    %c0_2 = arith.constant 0 : index
    %2 = vector.load %arg9[%c2, %c0_2] : memref<16x512xf32, #tpu.memory_space<vmem>>, vector<1x512xf32>
    %c3 = arith.constant 3 : index
    %c0_3 = arith.constant 0 : index
    %3 = vector.load %arg9[%c3, %c0_3] : memref<16x512xf32, #tpu.memory_space<vmem>>, vector<1x512xf32>
    %c4 = arith.constant 4 : index
    %c0_4 = arith.constant 0 : index
    %4 = vector.load %arg9[%c4, %c0_4] : memref<16x512xf32, #tpu.memory_space<vmem>>, vector<1x512xf32>
    %c5 = arith.constant 5 : index
    %c0_5 = arith.constant 0 : index
    %5 = vector.load %arg9[%c5, %c0_5] : memref<16x512xf32, #tpu.memory_space<vmem>>, vector<1x256xf32>
    %c6 = arith.constant 6 : index
    %c0_6 = arith.constant 0 : index
    %6 = vector.load %arg9[%c6, %c0_6] : memref<16x512xf32, #tpu.memory_space<vmem>>, vector<1x256xf32>
    %c7 = arith.constant 7 : index
    %c0_7 = arith.constant 0 : index
    %7 = vector.load %arg9[%c7, %c0_7] : memref<16x512xf32, #tpu.memory_space<vmem>>, vector<1x256xf32>
    %c8 = arith.constant 8 : index
    %c0_8 = arith.constant 0 : index
    %8 = vector.load %arg9[%c8, %c0_8] : memref<16x512xf32, #tpu.memory_space<vmem>>, vector<1x128xf32>
    %c0_9 = arith.constant 0 : index
    %c0_10 = arith.constant 0 : index
    %9 = vector.load %arg1[%c0_9, %c0_10] : memref<8x128xf32, #tpu.memory_space<vmem>>, vector<8x128xf32>
    %10 = arith.truncf %9 : vector<8x128xf32> to vector<8x128xbf16>
    %c0_11 = arith.constant 0 : index
    %c0_12 = arith.constant 0 : index
    %11 = vector.load %arg3[%c0_11, %c0_12] : memref<128x400xbf16, #tpu.memory_space<vmem>>, vector<128x400xbf16>
    %cst = arith.constant dense<0.000000e+00> : vector<8x400xf32>
    %12 = tpu.matmul %10, %11, %cst {dimension_numbers = #tpu.dot_dimension_numbers<[1], [0], [0], [1], [0, 0, 1, 1], [], []>} : vector<8x128xbf16>, vector<128x400xbf16>, vector<8x400xf32> -> vector<8x400xf32>
    %13 = vector.broadcast %0 : vector<1x400xf32> to vector<8x400xf32>
    %14 = arith.addf %12, %13 : vector<8x400xf32>
    %cst_13 = arith.constant 0.000000e+00 : f32
    %15 = vector.broadcast %cst_13 : f32 to vector<8x400xf32>
    %16 = arith.maximumf %14, %15 : vector<8x400xf32>
    %17 = arith.truncf %16 : vector<8x400xf32> to vector<8x400xbf16>
    %c0_14 = arith.constant 0 : index
    %c0_15 = arith.constant 0 : index
    %18 = vector.load %arg4[%c0_14, %c0_15] : memref<400x400xbf16, #tpu.memory_space<vmem>>, vector<400x400xbf16>
    %cst_16 = arith.constant dense<0.000000e+00> : vector<8x400xf32>
    %19 = tpu.matmul %17, %18, %cst_16 {dimension_numbers = #tpu.dot_dimension_numbers<[1], [0], [0], [1], [0, 0, 1, 1], [], []>} : vector<8x400xbf16>, vector<400x400xbf16>, vector<8x400xf32> -> vector<8x400xf32>
    %20 = vector.broadcast %1 : vector<1x400xf32> to vector<8x400xf32>
    %21 = arith.addf %19, %20 : vector<8x400xf32>
    %cst_17 = arith.constant 0.000000e+00 : f32
    %22 = vector.broadcast %cst_17 : f32 to vector<8x400xf32>
    %23 = arith.maximumf %21, %22 : vector<8x400xf32>
    %c0_18 = arith.constant 0 : index
    %c0_19 = arith.constant 0 : index
    %24 = vector.load %arg2[%c0_18, %c0_19] : memref<8x9xf32, #tpu.memory_space<vmem>>, vector<8x9xf32>
    %cst_20 = arith.constant dense<0.000000e+00> : vector<8xf32>
    %25 = vector.multi_reduction <add>, %23, %cst_20 [1] : vector<8x400xf32> to vector<8xf32>
    %26 = vector.shape_cast %25 : vector<8xf32> to vector<8x1xf32>
    %cst_21 = arith.constant dense<0.000000e+00> : vector<8xf32>
    %27 = vector.multi_reduction <add>, %24, %cst_21 [1] : vector<8x9xf32> to vector<8xf32>
    %28 = vector.shape_cast %27 : vector<8xf32> to vector<8x1xf32>
    %29 = arith.addf %26, %28 : vector<8x1xf32>
    %30 = arith.mulf %23, %23 : vector<8x400xf32>
    %cst_22 = arith.constant dense<0.000000e+00> : vector<8xf32>
    %31 = vector.multi_reduction <add>, %30, %cst_22 [1] : vector<8x400xf32> to vector<8xf32>
    %32 = vector.shape_cast %31 : vector<8xf32> to vector<8x1xf32>
    %33 = arith.mulf %24, %24 : vector<8x9xf32>
    %cst_23 = arith.constant dense<0.000000e+00> : vector<8xf32>
    %34 = vector.multi_reduction <add>, %33, %cst_23 [1] : vector<8x9xf32> to vector<8xf32>
    %35 = vector.shape_cast %34 : vector<8xf32> to vector<8x1xf32>
    %36 = arith.addf %32, %35 : vector<8x1xf32>
    %cst_24 = arith.constant 0.00244498788 : f32
    %37 = vector.broadcast %cst_24 : f32 to vector<8x1xf32>
    %38 = arith.mulf %29, %37 : vector<8x1xf32>
    %cst_25 = arith.constant 0.00244498788 : f32
    %39 = vector.broadcast %cst_25 : f32 to vector<8x1xf32>
    %40 = arith.mulf %36, %39 : vector<8x1xf32>
    %41 = arith.mulf %38, %38 : vector<8x1xf32>
    %42 = arith.subf %40, %41 : vector<8x1xf32>
    %cst_26 = arith.constant 9.99999974E-6 : f32
    %43 = vector.broadcast %cst_26 : f32 to vector<8x1xf32>
    %44 = arith.addf %42, %43 : vector<8x1xf32>
    %45 = math.rsqrt %44 : vector<8x1xf32>
    %46 = vector.broadcast %38 : vector<8x1xf32> to vector<8x400xf32>
    %47 = arith.subf %23, %46 : vector<8x400xf32>
    %48 = vector.broadcast %45 : vector<8x1xf32> to vector<8x400xf32>
    %49 = arith.mulf %47, %48 : vector<8x400xf32>
    %50 = vector.broadcast %38 : vector<8x1xf32> to vector<8x9xf32>
    %51 = arith.subf %24, %50 : vector<8x9xf32>
    %52 = vector.broadcast %45 : vector<8x1xf32> to vector<8x9xf32>
    %53 = arith.mulf %51, %52 : vector<8x9xf32>
    %54 = arith.truncf %49 : vector<8x400xf32> to vector<8x400xbf16>
    %c0_27 = arith.constant 0 : index
    %c0_28 = arith.constant 0 : index
    %55 = vector.load %arg5[%c0_27, %c0_28] : memref<400x512xbf16, #tpu.memory_space<vmem>>, vector<400x512xbf16>
    %cst_29 = arith.constant dense<0.000000e+00> : vector<8x512xf32>
    %56 = tpu.matmul %54, %55, %cst_29 {dimension_numbers = #tpu.dot_dimension_numbers<[1], [0], [0], [1], [0, 0, 1, 1], [], []>} : vector<8x400xbf16>, vector<400x512xbf16>, vector<8x512xf32> -> vector<8x512xf32>
    %c0_30 = arith.constant 0 : index
    %c0_31 = arith.constant 0 : index
    %57 = vector.load %arg6[%c0_30, %c0_31] : memref<9x512xf32, #tpu.memory_space<vmem>>, vector<9x512xf32>
    %cst_32 = arith.constant dense<0.000000e+00> : vector<8x512xf32>
    %58 = tpu.matmul %53, %57, %cst_32 {dimension_numbers = #tpu.dot_dimension_numbers<[1], [0], [0], [1], [0, 0, 1, 1], [], []>} : vector<8x9xf32>, vector<9x512xf32>, vector<8x512xf32> -> vector<8x512xf32>
    %59 = arith.addf %56, %58 : vector<8x512xf32>
    %60 = vector.broadcast %2 : vector<1x512xf32> to vector<8x512xf32>
    %61 = arith.addf %59, %60 : vector<8x512xf32>
    %cst_33 = arith.constant dense<0.000000e+00> : vector<8xf32>
    %62 = vector.multi_reduction <add>, %61, %cst_33 [1] : vector<8x512xf32> to vector<8xf32>
    %63 = vector.shape_cast %62 : vector<8xf32> to vector<8x1xf32>
    %64 = arith.mulf %61, %61 : vector<8x512xf32>
    %cst_34 = arith.constant dense<0.000000e+00> : vector<8xf32>
    %65 = vector.multi_reduction <add>, %64, %cst_34 [1] : vector<8x512xf32> to vector<8xf32>
    %66 = vector.shape_cast %65 : vector<8xf32> to vector<8x1xf32>
    %cst_35 = arith.constant 0.001953125 : f32
    %67 = vector.broadcast %cst_35 : f32 to vector<8x1xf32>
    %68 = arith.mulf %63, %67 : vector<8x1xf32>
    %cst_36 = arith.constant 0.001953125 : f32
    %69 = vector.broadcast %cst_36 : f32 to vector<8x1xf32>
    %70 = arith.mulf %66, %69 : vector<8x1xf32>
    %71 = arith.mulf %68, %68 : vector<8x1xf32>
    %72 = arith.subf %70, %71 : vector<8x1xf32>
    %73 = vector.broadcast %68 : vector<8x1xf32> to vector<8x512xf32>
    %74 = arith.subf %61, %73 : vector<8x512xf32>
    %cst_37 = arith.constant 9.99999974E-6 : f32
    %75 = vector.broadcast %cst_37 : f32 to vector<8x1xf32>
    %76 = arith.addf %72, %75 : vector<8x1xf32>
    %77 = math.rsqrt %76 : vector<8x1xf32>
    %78 = vector.broadcast %77 : vector<8x1xf32> to vector<8x512xf32>
    %79 = arith.mulf %74, %78 : vector<8x512xf32>
    %80 = vector.broadcast %3 : vector<1x512xf32> to vector<8x512xf32>
    %81 = arith.mulf %79, %80 : vector<8x512xf32>
    %82 = vector.broadcast %4 : vector<1x512xf32> to vector<8x512xf32>
    %83 = arith.addf %81, %82 : vector<8x512xf32>
    %84 = math.tanh %83 : vector<8x512xf32>
    %85 = arith.truncf %84 : vector<8x512xf32> to vector<8x512xbf16>
    %c0_38 = arith.constant 0 : index
    %c0_39 = arith.constant 0 : index
    %86 = vector.load %arg7[%c0_38, %c0_39] : memref<512x256xbf16, #tpu.memory_space<vmem>>, vector<512x256xbf16>
    %cst_40 = arith.constant dense<0.000000e+00> : vector<8x256xf32>
    %87 = tpu.matmul %85, %86, %cst_40 {dimension_numbers = #tpu.dot_dimension_numbers<[1], [0], [0], [1], [0, 0, 1, 1], [], []>} : vector<8x512xbf16>, vector<512x256xbf16>, vector<8x256xf32> -> vector<8x256xf32>
    %88 = vector.broadcast %5 : vector<1x256xf32> to vector<8x256xf32>
    %89 = arith.addf %87, %88 : vector<8x256xf32>
    %cst_41 = arith.constant dense<0.000000e+00> : vector<8xf32>
    %90 = vector.multi_reduction <add>, %89, %cst_41 [1] : vector<8x256xf32> to vector<8xf32>
    %91 = vector.shape_cast %90 : vector<8xf32> to vector<8x1xf32>
    %92 = arith.mulf %89, %89 : vector<8x256xf32>
    %cst_42 = arith.constant dense<0.000000e+00> : vector<8xf32>
    %93 = vector.multi_reduction <add>, %92, %cst_42 [1] : vector<8x256xf32> to vector<8xf32>
    %94 = vector.shape_cast %93 : vector<8xf32> to vector<8x1xf32>
    %cst_43 = arith.constant 3.906250e-03 : f32
    %95 = vector.broadcast %cst_43 : f32 to vector<8x1xf32>
    %96 = arith.mulf %91, %95 : vector<8x1xf32>
    %cst_44 = arith.constant 3.906250e-03 : f32
    %97 = vector.broadcast %cst_44 : f32 to vector<8x1xf32>
    %98 = arith.mulf %94, %97 : vector<8x1xf32>
    %99 = arith.mulf %96, %96 : vector<8x1xf32>
    %100 = arith.subf %98, %99 : vector<8x1xf32>
    %101 = vector.broadcast %96 : vector<8x1xf32> to vector<8x256xf32>
    %102 = arith.subf %89, %101 : vector<8x256xf32>
    %cst_45 = arith.constant 9.99999974E-6 : f32
    %103 = vector.broadcast %cst_45 : f32 to vector<8x1xf32>
    %104 = arith.addf %100, %103 : vector<8x1xf32>
    %105 = math.rsqrt %104 : vector<8x1xf32>
    %106 = vector.broadcast %105 : vector<8x1xf32> to vector<8x256xf32>
    %107 = arith.mulf %102, %106 : vector<8x256xf32>
    %108 = vector.broadcast %6 : vector<1x256xf32> to vector<8x256xf32>
    %109 = arith.mulf %107, %108 : vector<8x256xf32>
    %110 = vector.broadcast %7 : vector<1x256xf32> to vector<8x256xf32>
    %111 = arith.addf %109, %110 : vector<8x256xf32>
    %112 = math.tanh %111 : vector<8x256xf32>
    %c0_46 = arith.constant 0 : index
    %c0_47 = arith.constant 0 : index
    %113 = vector.load %arg8[%c0_46, %c0_47] : memref<256x128xf32, #tpu.memory_space<vmem>>, vector<256x128xf32>
    %cst_48 = arith.constant dense<0.000000e+00> : vector<8x128xf32>
    %114 = tpu.matmul %112, %113, %cst_48 {dimension_numbers = #tpu.dot_dimension_numbers<[1], [0], [0], [1], [0, 0, 1, 1], [], []>} : vector<8x256xf32>, vector<256x128xf32>, vector<8x128xf32> -> vector<8x128xf32>
    %115 = vector.broadcast %8 : vector<1x128xf32> to vector<8x128xf32>
    %116 = arith.addf %114, %115 : vector<8x128xf32>
    %c0_49 = arith.constant 0 : index
    %c0_50 = arith.constant 0 : index
    %117 = vector.load %arg10[%c0_49, %c0_50] : memref<8x128xf32, #tpu.memory_space<vmem>>, vector<8x128xf32>
    tpu.vector_store %arg10[%c0_49, %c0_50], %116 {strides = array<i32>} : memref<8x128xf32, #tpu.memory_space<vmem>>, vector<8x128xf32>,
    return
  }
  func.func @transform_0(%arg0: i32) -> (i32, i32) {
    %c0_i32 = arith.constant 0 : i32
    %c0_i32_0 = arith.constant 0 : i32
    return %arg0, %c0_i32 : i32, i32
  }
  func.func @transform_1(%arg0: i32) -> (i32, i32) {
    %c0_i32 = arith.constant 0 : i32
    %c0_i32_0 = arith.constant 0 : i32
    return %arg0, %c0_i32 : i32, i32
  }
  func.func @transform_2(%arg0: i32) -> (i32, i32) {
    %c0_i32 = arith.constant 0 : i32
    %c0_i32_0 = arith.constant 0 : i32
    %c0_i32_1 = arith.constant 0 : i32
    return %c0_i32, %c0_i32_0 : i32, i32
  }
  func.func @transform_3(%arg0: i32) -> (i32, i32) {
    %c0_i32 = arith.constant 0 : i32
    %c0_i32_0 = arith.constant 0 : i32
    %c0_i32_1 = arith.constant 0 : i32
    return %c0_i32, %c0_i32_0 : i32, i32
  }
  func.func @transform_4(%arg0: i32) -> (i32, i32) {
    %c0_i32 = arith.constant 0 : i32
    %c0_i32_0 = arith.constant 0 : i32
    %c0_i32_1 = arith.constant 0 : i32
    return %c0_i32, %c0_i32_0 : i32, i32
  }
  func.func @transform_5(%arg0: i32) -> (i32, i32) {
    %c0_i32 = arith.constant 0 : i32
    %c0_i32_0 = arith.constant 0 : i32
    %c0_i32_1 = arith.constant 0 : i32
    return %c0_i32, %c0_i32_0 : i32, i32
  }
  func.func @transform_6(%arg0: i32) -> (i32, i32) {
    %c0_i32 = arith.constant 0 : i32
    %c0_i32_0 = arith.constant 0 : i32
    %c0_i32_1 = arith.constant 0 : i32
    return %c0_i32, %c0_i32_0 : i32, i32
  }
  func.func @transform_7(%arg0: i32) -> (i32, i32) {
    %c0_i32 = arith.constant 0 : i32
    %c0_i32_0 = arith.constant 0 : i32
    %c0_i32_1 = arith.constant 0 : i32
    return %c0_i32, %c0_i32_0 : i32, i32
  }
  func.func @transform_8(%arg0: i32) -> (i32, i32) {
    %c0_i32 = arith.constant 0 : i32
    %c0_i32_0 = arith.constant 0 : i32
    %c0_i32_1 = arith.constant 0 : i32
    return %c0_i32, %c0_i32_0 : i32, i32
  }
  func.func @transform_9(%arg0: i32) -> (i32, i32) {
    %c0_i32 = arith.constant 0 : i32
    %c0_i32_0 = arith.constant 0 : i32
    return %arg0, %c0_i32 : i32, i32
  }
}

</mosaic_0001>

<llo_original>
// kernel: tpu_custom_call.1
$region0: #{tpu_custom_call.1}
  #allocation0 [shape = 'u32[]', space=smem, size = 0x4, offset = 0x4, fixed_abs, tag = 'smem constant byte address 0x4 - core index']
  #allocation1 [shape = 'u32[144,128]{1,0:T(1,128)}', space=vmem, size = 0x12000, scoped, tag = 'internal scratch']
  %s0 = inlined_call_operand.vmem [shape: f32[8,128], index: 0, kind: input, shape index: {}]
  %s1 = inlined_call_operand.vmem [shape: f32[8,9], index: 1, kind: input, shape index: {}]
  %s2 = inlined_call_operand.vmem [shape: bf16[128,400], index: 2, kind: input, shape index: {}]
  %s3 = inlined_call_operand.hbm [shape: bf16[400,400], index: 3, kind: input, shape index: {}]
  %s4 = inlined_call_operand.hbm [shape: bf16[400,512], index: 4, kind: input, shape index: {}]
  %s5 = inlined_call_operand.vmem [shape: f32[9,512], index: 5, kind: input, shape index: {}]
  %s6 = inlined_call_operand.hbm [shape: bf16[512,256], index: 6, kind: input, shape index: {}]
  %s7 = inlined_call_operand.vmem [shape: f32[256,128], index: 7, kind: input, shape index: {}]
  %s8 = inlined_call_operand.vmem [shape: f32[16,512], index: 8, kind: input, shape index: {}]
  %s9 = inlined_call_operand.hbm [shape: f32[8,128], index: 9, kind: output, shape index: {}]
  %s10 = sld [smem:[#allocation0]]
  $region58: #{tpu_custom_call.1} parent=0
    _
  %s12 = ssub.s32 1, %s10
  %s13 = scalar_select 0, %s12, %s10
  $region1: #{tpu_custom_call.1} parent=0
    #allocation2 [shape = 'u8[409600]{0}', space=vmem, size = 0x64000, scoped, tag = 'input window, operand 3, single buffered']
    #allocation3 [shape = 's32[1]{0}', space=sflag, size = 0x4, scoped, tag = 'scoped memory for tpu_custom_call.1']
    #allocation4 [shape = 's32[1]{0}', space=sflag, size = 0x4, scoped, tag = 'scoped memory for tpu_custom_call.1']
    #allocation5 [shape = 'u8[409600]{0}', space=vmem, size = 0x64000, scoped, tag = 'input window, operand 4, single buffered']
    #allocation6 [shape = 's32[1]{0}', space=sflag, size = 0x4, scoped, tag = 'scoped memory for tpu_custom_call.1']
    #allocation7 [shape = 'u8[262144]{0}', space=vmem, size = 0x40000, scoped, tag = 'input window, operand 6, single buffered']
    #allocation8 [shape = 'u8[4096]{0}', space=vmem, size = 0x1000, scoped, tag = 'output window, operand 0, single buffered']
    %14 = vsyncpa [#allocation3], 0
    %15 = vsyncpa [#allocation6], 0
    %16 = vsyncpa [#allocation4], 0
    // Predicated region
    $region2: #{tpu_custom_call.1} parent=1 // pred_check
      _
    $region3: #{tpu_custom_call.1} parent=1 // pred_check_branch
      %18 = sbr.rel (0) target = $region5
    $region4: #{tpu_custom_call.1} parent=1 // pred_region
      _
    $region5: #{tpu_custom_call.1} parent=1 // pred_fallthru
      _
    // Predicated region
    $region6: #{tpu_custom_call.1} parent=1 // pred_check
      _
    $region7: #{tpu_custom_call.1} parent=1 // pred_check_branch
      %20 = sbr.rel (0) target = $region9
    $region8: #{tpu_custom_call.1} parent=1 // pred_region
      _
    $region9: #{tpu_custom_call.1} parent=1 // pred_fallthru
      _
    // Predicated region
    $region10: #{tpu_custom_call.1} parent=1 // pred_check
      _
    $region11: #{tpu_custom_call.1} parent=1 // pred_check_branch
      %22 = sbr.rel (0) target = $region13
    $region12: #{tpu_custom_call.1} parent=1 // pred_region
      _
    $region13: #{tpu_custom_call.1} parent=1 // pred_fallthru
      _
    // Predicated region
    $region14: #{tpu_custom_call.1} parent=1 // pred_check
      _
    $region15: #{tpu_custom_call.1} parent=1 // pred_check_branch
      %24 = sbr.rel (0) target = $region17
    $region16: #{tpu_custom_call.1} parent=1 // pred_region
      %s26 = ssub.s32 12800, 12800
      %27 = vsyncadd [#allocation3], %s26
      %s28 = sshll.u32 [#allocation2], 4
      %s29 = int_to_ptr.vmem [resolvable:$true] %s28
      %34 = dma.hbm_to_vmem [thread:$0]  %s3, 12800, %s29, [#allocation3], 256, 256, 16
    $region17: #{tpu_custom_call.1} parent=1 // pred_fallthru
      _
    // Predicated region
    $region18: #{tpu_custom_call.1} parent=1 // pred_check
      _
    $region19: #{tpu_custom_call.1} parent=1 // pred_check_branch
      %36 = sbr.rel (0) target = $region21
    $region20: #{tpu_custom_call.1} parent=1 // pred_region
      %s38 = ssub.s32 12800, 12800
      %39 = vsyncadd [#allocation6], %s38
      %s40 = sshll.u32 [#allocation5], 4
      %s41 = int_to_ptr.vmem [resolvable:$true] %s40
      %46 = dma.hbm_to_vmem [thread:$0]  %s4, 12800, %s41, [#allocation6], 256, 256, 16
    $region21: #{tpu_custom_call.1} parent=1 // pred_fallthru
      _
    // Predicated region
    $region22: #{tpu_custom_call.1} parent=1 // pred_check
      _
    $region23: #{tpu_custom_call.1} parent=1 // pred_check_branch
      %48 = sbr.rel (0) target = $region25
    $region24: #{tpu_custom_call.1} parent=1 // pred_region
      _
    $region25: #{tpu_custom_call.1} parent=1 // pred_fallthru
      _
    // Predicated region
    $region26: #{tpu_custom_call.1} parent=1 // pred_check
      _
    $region27: #{tpu_custom_call.1} parent=1 // pred_check_branch
      %50 = sbr.rel (0) target = $region29
    $region28: #{tpu_custom_call.1} parent=1 // pred_region
      %s52 = ssub.s32 8192, 8192
      %53 = vsyncadd [#allocation6], %s52
      %s54 = sshll.u32 [#allocation7], 4
      %s55 = int_to_ptr.vmem [resolvable:$true] %s54
      %60 = dma.hbm_to_vmem [thread:$0]  %s6, 8192, %s55, [#allocation6], 128, 128, 8
    $region29: #{tpu_custom_call.1} parent=1 // pred_fallthru
      _
    // Predicated region
    $region30: #{tpu_custom_call.1} parent=1 // pred_check
      _
    $region31: #{tpu_custom_call.1} parent=1 // pred_check_branch
      %62 = sbr.rel (0) target = $region33
    $region32: #{tpu_custom_call.1} parent=1 // pred_region
      _
    $region33: #{tpu_custom_call.1} parent=1 // pred_fallthru
      _
    // Predicated region
    $region34: #{tpu_custom_call.1} parent=1 // pred_check
      _
    $region35: #{tpu_custom_call.1} parent=1 // pred_check_branch
      %64 = sbr.rel (0) target = $region37
    $region36: #{tpu_custom_call.1} parent=1 // pred_region
      _
    $region37: #{tpu_custom_call.1} parent=1 // pred_fallthru
      _
    // Predicated region
    $region38: #{tpu_custom_call.1} parent=1 // pred_check
      _
    $region39: #{tpu_custom_call.1} parent=1 // pred_check_branch
      %66 = sbr.rel (0) target = $region41
    $region40: #{tpu_custom_call.1} parent=1 // pred_region
      %67 = dma.done [#allocation3], 12800
    $region41: #{tpu_custom_call.1} parent=1 // pred_fallthru
      _
    // Predicated region
    $region42: #{tpu_custom_call.1} parent=1 // pred_check
      _
    $region43: #{tpu_custom_call.1} parent=1 // pred_check_branch
      %69 = sbr.rel (0) target = $region45
    $region44: #{tpu_custom_call.1} parent=1 // pred_region
      %70 = dma.done [#allocation6], 12800
    $region45: #{tpu_custom_call.1} parent=1 // pred_fallthru
      _
    // Predicated region
    $region46: #{tpu_custom_call.1} parent=1 // pred_check
      _
    $region47: #{tpu_custom_call.1} parent=1 // pred_check_branch
      %72 = sbr.rel (0) target = $region49
    $region48: #{tpu_custom_call.1} parent=1 // pred_region
      %73 = dma.done [#allocation6], 8192
    $region49: #{tpu_custom_call.1} parent=1 // pred_fallthru
      _
    %v75 = vld [vmem:[%s8] ss:$8 sm:$0xf]
    %s76 = scalar_lea.vmem %s8, 1
    %v77 = vld [vmem:[%s76] ss:$8 sm:$0xf]
    %s78 = scalar_lea.vmem %s8, 2
    %v79 = vld [vmem:[%s78] ss:$8 sm:$0xf]
    %s80 = scalar_lea.vmem %s8, 3
    %v81 = vld [vmem:[%s80] ss:$8 sm:$0xf]
    %s82 = scalar_lea.vmem %s8, 4
    %v83 = vld [vmem:[%s82] ss:$8 sm:$0xf]
    %s84 = scalar_lea.vmem %s8, 5
    %v85 = vld [vmem:[%s84] ss:$8 sm:$0x3]
    %s86 = scalar_lea.vmem %s8, 6
    %v87 = vld [vmem:[%s86] ss:$8 sm:$0x3]
    %s88 = scalar_lea.vmem %s8, 7
    %v89 = vld [vmem:[%s88] ss:$8 sm:$0x3]
    %v90 = vld [vmem:[%s8 + $0x20] ss:$0 sm:$0xff]
    %v91 = vld [vmem:[%s0] sm:$0xff]
    %v92 = vpack.c.bf16 %v91, %v91
    %v93 = vld [vmem:[%s2] sm:$0xff]
    %v94 = vld [vmem:[%s2 + $0x8] sm:$0xff]
    %v95 = vld [vmem:[%s2 + $0x10] sm:$0xff]
    %v96 = vld [vmem:[%s2 + $0x18] sm:$0xff]
    %v97 = vld [vmem:[%s2 + $0x20] sm:$0xff]
    %v98 = vld [vmem:[%s2 + $0x28] sm:$0xff]
    %v99 = vld [vmem:[%s2 + $0x30] sm:$0xff]
    %v100 = vld [vmem:[%s2 + $0x38] sm:$0xff]
    %v101 = vld [vmem:[%s2 + $0x40] sm:$0xff]
    %v102 = vld [vmem:[%s2 + $0x48] sm:$0xff]
    %v103 = vld [vmem:[%s2 + $0x50] sm:$0xff]
    %v104 = vld [vmem:[%s2 + $0x58] sm:$0xff]
    %v105 = vld [vmem:[%s2 + $0x60] sm:$0xff]
    %v106 = vld [vmem:[%s2 + $0x68] sm:$0xff]
    %v107 = vld [vmem:[%s2 + $0x70] sm:$0xff]
    %v108 = vld [vmem:[%s2 + $0x78] sm:$0xff]
    %v109 = vld [vmem:[%s2 + $0x80] sm:$0xff]
    %v110 = vld [vmem:[%s2 + $0x88] sm:$0xff]
    %v111 = vld [vmem:[%s2 + $0x90] sm:$0xff]
    %v112 = vld [vmem:[%s2 + $0x98] sm:$0xff]
    %v113 = vld [vmem:[%s2 + $0xa0] sm:$0xff]
    %v114 = vld [vmem:[%s2 + $0xa8] sm:$0xff]
    %v115 = vld [vmem:[%s2 + $0xb0] sm:$0xff]
    %v116 = vld [vmem:[%s2 + $0xb8] sm:$0xff]
    %v117 = vld [vmem:[%s2 + $0xc0] sm:$0xff]
    %v118 = vld [vmem:[%s2 + $0xc8] sm:$0xff]
    %v119 = vld [vmem:[%s2 + $0xd0] sm:$0xff]
    %v120 = vld [vmem:[%s2 + $0xd8] sm:$0xff]
    %v121 = vld [vmem:[%s2 + $0xe0] sm:$0xff]
    %v122 = vld [vmem:[%s2 + $0xe8] sm:$0xff]
    %v123 = vld [vmem:[%s2 + $0xf0] sm:$0xff]
    %v124 = vld [vmem:[%s2 + $0xf8] sm:$0xff]
    %v126 = vlaneseq
    %v127 = vshrl.u32 %v126, 7
    %v128 = vsub.s32 0, %v127
    %v129 = vrot.slane %v75, %v128
    %v130 = vlaneseq
    %v131 = vshrl.u32 %v130, 7
    %v132 = vsub.s32 1, %v131
    %v133 = vrot.slane %v75, %v132
    %v134 = vlaneseq
    %v135 = vshrl.u32 %v134, 7
    %v136 = vsub.s32 2, %v135
    %v137 = vrot.slane %v75, %v136
    %v138 = vlaneseq
    %v139 = vshrl.u32 %v138, 7
    %v140 = vsub.s32 3, %v139
    %v141 = vrot.slane %v75, %v140
    %v178 = vunpack.c.l.b16 %v93
    %v179 = vunpack.c.h.b16 %v93
    %v180 = vunpack.c.l.b16 %v94
    %v181 = vunpack.c.h.b16 %v94
    %v182 = vunpack.c.l.b16 %v95
    %v183 = vunpack.c.h.b16 %v95
    %v184 = vunpack.c.l.b16 %v96
    %v185 = vunpack.c.h.b16 %v96
    %v186 = vunpack.c.l.b16 %v97
    %v187 = vunpack.c.h.b16 %v97
    %v188 = vunpack.c.l.b16 %v98
    %v189 = vunpack.c.h.b16 %v98
    %v190 = vunpack.c.l.b16 %v99
    %v191 = vunpack.c.h.b16 %v99
    %v192 = vunpack.c.l.b16 %v100
    %v193 = vunpack.c.h.b16 %v100
    %v194 = vunpack.c.l.b16 %v101
    %v195 = vunpack.c.h.b16 %v101
    %v196 = vunpack.c.l.b16 %v102
    %v197 = vunpack.c.h.b16 %v102
    %v198 = vunpack.c.l.b16 %v103
    %v199 = vunpack.c.h.b16 %v103
    %v200 = vunpack.c.l.b16 %v104
    %v201 = vunpack.c.h.b16 %v104
    %v202 = vunpack.c.l.b16 %v105
    %v203 = vunpack.c.h.b16 %v105
    %v204 = vunpack.c.l.b16 %v106
    %v205 = vunpack.c.h.b16 %v106
    %v206 = vunpack.c.l.b16 %v107
    %v207 = vunpack.c.h.b16 %v107
    %v208 = vunpack.c.l.b16 %v108
    %v209 = vunpack.c.h.b16 %v108
    %v210 = vunpack.c.l.b16 %v109
    %v211 = vunpack.c.h.b16 %v109
    %v212 = vunpack.c.l.b16 %v110
    %v213 = vunpack.c.h.b16 %v110
    %v214 = vunpack.c.l.b16 %v111
    %v215 = vunpack.c.h.b16 %v111
    %v216 = vunpack.c.l.b16 %v112
    %v217 = vunpack.c.h.b16 %v112
    %v218 = vunpack.c.l.b16 %v113
    %v219 = vunpack.c.h.b16 %v113
    %v220 = vunpack.c.l.b16 %v114
    %v221 = vunpack.c.h.b16 %v114
    %v222 = vunpack.c.l.b16 %v115
    %v223 = vunpack.c.h.b16 %v115
    %v224 = vunpack.c.l.b16 %v116
    %v225 = vunpack.c.h.b16 %v116
    %v226 = vunpack.c.l.b16 %v117
    %v227 = vunpack.c.h.b16 %v117
    %v228 = vunpack.c.l.b16 %v118
    %v229 = vunpack.c.h.b16 %v118
    %v230 = vunpack.c.l.b16 %v119
    %v231 = vunpack.c.h.b16 %v119
    %v232 = vunpack.c.l.b16 %v120
    %v233 = vunpack.c.h.b16 %v120
    %v234 = vunpack.c.l.b16 %v121
    %v235 = vunpack.c.h.b16 %v121
    %v236 = vunpack.c.l.b16 %v122
    %v237 = vunpack.c.h.b16 %v122
    %v238 = vunpack.c.l.b16 %v123
    %v239 = vunpack.c.h.b16 %v123
    %v240 = vunpack.c.l.b16 %v124
    %v241 = vunpack.c.h.b16 %v124
    %v242 = vpack.c.b16 %v182, %v178
    %v243 = vpack.c.b16 %v183, %v179
    %v244 = vpack.c.b16 %v184, %v180
    %v245 = vpack.c.b16 %v185, %v181
    %v246 = vpack.c.b16 %v190, %v186
    %v247 = vpack.c.b16 %v191, %v187
    %v248 = vpack.c.b16 %v192, %v188
    %v249 = vpack.c.b16 %v193, %v189
    %v250 = vpack.c.b16 %v198, %v194
    %v251 = vpack.c.b16 %v199, %v195
    %v252 = vpack.c.b16 %v200, %v196
    %v253 = vpack.c.b16 %v201, %v197
    %v254 = vpack.c.b16 %v206, %v202
    %v255 = vpack.c.b16 %v207, %v203
    %v256 = vpack.c.b16 %v208, %v204
    %v257 = vpack.c.b16 %v209, %v205
    %v258 = vpack.c.b16 %v214, %v210
    %v259 = vpack.c.b16 %v215, %v211
    %v260 = vpack.c.b16 %v216, %v212
    %v261 = vpack.c.b16 %v217, %v213
    %v262 = vpack.c.b16 %v222, %v218
    %v263 = vpack.c.b16 %v223, %v219
    %v264 = vpack.c.b16 %v224, %v220
    %v265 = vpack.c.b16 %v225, %v221
    %v266 = vpack.c.b16 %v230, %v226
    %v267 = vpack.c.b16 %v231, %v227
    %v268 = vpack.c.b16 %v232, %v228
    %v269 = vpack.c.b16 %v233, %v229
    %v270 = vpack.c.b16 %v238, %v234
    %v271 = vpack.c.b16 %v239, %v235
    %v272 = vpack.c.b16 %v240, %v236
    %v273 = vpack.c.b16 %v241, %v237
    %306 = vmatprep.subr.bf16.mxu0 %v243
    %307 = vmatpush1.bf16.msra.mxu0 %v242
    %308 = vmatprep.subr.bf16.mxu0 %v247
    %309 = vmatpush1.bf16.msra.mxu0 %v246
    %310 = vmatprep.subr.bf16.mxu0 %v251
    %311 = vmatpush1.bf16.msra.mxu0 %v250
    %312 = vmatprep.subr.bf16.mxu0 %v255
    %313 = vmatpush1.bf16.msra.mxu0 %v254
    %314 = vmatprep.subr.bf16.mxu0 %v259
    %315 = vmatpush1.bf16.msra.mxu0 %v258
    %316 = vmatprep.subr.bf16.mxu0 %v263
    %317 = vmatpush1.bf16.msra.mxu0 %v262
    %318 = vmatprep.subr.bf16.mxu0 %v267
    %319 = vmatpush1.bf16.msra.mxu0 %v266
    %320 = vmatprep.subr.bf16.mxu0 %v271
    %321 = vmatpush1.bf16.msra.mxu0 %v270
    %322 = vmatprep.subr.bf16.mxu0 0
    %323 = vmatpush1.bf16.msra.mxu0 0
    %324 = vmatprep.subr.bf16.mxu0 0
    %325 = vmatpush1.bf16.msra.mxu0 0
    %326 = vmatprep.subr.bf16.mxu0 0
    %327 = vmatpush1.bf16.msra.mxu0 0
    %328 = vmatprep.subr.bf16.mxu0 0
    %329 = vmatpush1.bf16.msra.mxu0 0
    %330 = vmatprep.subr.bf16.mxu0 0
    %331 = vmatpush1.bf16.msra.mxu0 0
    %332 = vmatprep.subr.bf16.mxu0 0
    %333 = vmatpush1.bf16.msra.mxu0 0
    %334 = vmatprep.subr.bf16.mxu0 0
    %335 = vmatpush1.bf16.msra.mxu0 0
    %336 = vmatprep.subr.bf16.mxu0 0
    %337 = vmatpush1.bf16.msra.mxu0 0
    %338 = vmatprep.mubr.bf16.mxu0 0
    %339 = vmatmul.mubr.bf16.gmra.mrb[0].mxu0 %v92
    %v340 = vpop.f32.mrb[0].mxu0
    %v341 = vadd.f32 %v129, %v340
    %v342 = vpop.f32.mrb[0].mxu0
    %v343 = vadd.f32 %v133, %v342
    %v344 = vpop.f32.mrb[0].mxu0
    %v345 = vpop.f32.mrb[0].mxu0
    %346 = vdwg.mxu0
    %347 = vmatprep.subr.bf16.mxu0 %v245
    %348 = vmatpush1.bf16.msra.mxu0 %v244
    %349 = vmatprep.subr.bf16.mxu0 %v249
    %350 = vmatpush1.bf16.msra.mxu0 %v248
    %351 = vmatprep.subr.bf16.mxu0 %v253
    %352 = vmatpush1.bf16.msra.mxu0 %v252
    %353 = vmatprep.subr.bf16.mxu0 %v257
    %354 = vmatpush1.bf16.msra.mxu0 %v256
    %355 = vmatprep.subr.bf16.mxu0 %v261
    %356 = vmatpush1.bf16.msra.mxu0 %v260
    %357 = vmatprep.subr.bf16.mxu0 %v265
    %358 = vmatpush1.bf16.msra.mxu0 %v264
    %359 = vmatprep.subr.bf16.mxu0 %v269
    %360 = vmatpush1.bf16.msra.mxu0 %v268
    %361 = vmatprep.subr.bf16.mxu0 %v273
    %362 = vmatpush1.bf16.msra.mxu0 %v272
    %363 = vmatprep.subr.bf16.mxu0 0
    %364 = vmatpush1.bf16.msra.mxu0 0
    %365 = vmatprep.subr.bf16.mxu0 0
    %366 = vmatpush1.bf16.msra.mxu0 0
    %367 = vmatprep.subr.bf16.mxu0 0
    %368 = vmatpush1.bf16.msra.mxu0 0
    %369 = vmatprep.subr.bf16.mxu0 0
    %370 = vmatpush1.bf16.msra.mxu0 0
    %371 = vmatprep.subr.bf16.mxu0 0
    %372 = vmatpush1.bf16.msra.mxu0 0
    %373 = vmatprep.subr.bf16.mxu0 0
    %374 = vmatpush1.bf16.msra.mxu0 0
    %375 = vmatprep.subr.bf16.mxu0 0
    %376 = vmatpush1.bf16.msra.mxu0 0
    %377 = vmatprep.subr.bf16.mxu0 0
    %378 = vmatpush1.bf16.msra.mxu0 0
    %379 = vmatprep.mubr.bf16.mxu0 0
    %380 = vmatmul.mubr.bf16.gmra.mrb[0].mxu0 %v92
    %v381 = vpop.f32.mrb[0].mxu0
    %v382 = vadd.f32 %v137, %v381
    %v383 = vpop.f32.mrb[0].mxu0
    %v384 = vadd.f32 %v141, %v383
    %v385 = vpop.f32.mrb[0].mxu0
    %v386 = vpop.f32.mrb[0].mxu0
    %387 = vdwg.mxu0
    %v388 = vmax.f32 %v341, 0.0
    %v389 = vmax.f32 %v343, 0.0
    %v390 = vmax.f32 %v382, 0.0
    %v391 = vmax.f32 %v384, 0.0
    %v392 = vpack.c.bf16 %v388, %v388
    %v393 = vpack.c.bf16 %v389, %v389
    %v394 = vpack.c.bf16 %v390, %v390
    %v395 = vpack.c.bf16 %v391, %v391
    %v396 = vld [vmem:[#allocation2] sm:$0xff]
    %v397 = vld [vmem:[#allocation2 + $0x8] sm:$0xff]
    %v398 = vld [vmem:[#allocation2 + $0x10] sm:$0xff]
    %v399 = vld [vmem:[#allocation2 + $0x18] sm:$0xff]
    %v400 = vld [vmem:[#allocation2 + $0x20] sm:$0xff]
    %v401 = vld [vmem:[#allocation2 + $0x28] sm:$0xff]
    %v402 = vld [vmem:[#allocation2 + $0x30] sm:$0xff]
    %v403 = vld [vmem:[#allocation2 + $0x38] sm:$0xff]
    %v404 = vld [vmem:[#allocation2 + $0x40] sm:$0xff]
    %v405 = vld [vmem:[#allocation2 + $0x48] sm:$0xff]
    %v406 = vld [vmem:[#allocation2 + $0x50] sm:$0xff]
    %v407 = vld [vmem:[#allocation2 + $0x58] sm:$0xff]
    %v408 = vld [vmem:[#allocation2 + $0x60] sm:$0xff]
    %v409 = vld [vmem:[#allocation2 + $0x68] sm:$0xff]
    %v410 = vld [vmem:[#allocation2 + $0x70] sm:$0xff]
    %v411 = vld [vmem:[#allocation2 + $0x78] sm:$0xff]
    %v412 = vld [vmem:[#allocation2 + $0x80] sm:$0xff]
    %v413 = vld [vmem:[#allocation2 + $0x88] sm:$0xff]
    %v414 = vld [vmem:[#allocation2 + $0x90] sm:$0xff]
    %v415 = vld [vmem:[#allocation2 + $0x98] sm:$0xff]
    %v416 = vld [vmem:[#allocation2 + $0xa0] sm:$0xff]
    %v417 = vld [vmem:[#allocation2 + $0xa8] sm:$0xff]
    %v418 = vld [vmem:[#allocation2 + $0xb0] sm:$0xff]
    %v419 = vld [vmem:[#allocation2 + $0xb8] sm:$0xff]
    %v420 = vld [vmem:[#allocation2 + $0xc0] sm:$0xff]
    %v421 = vld [vmem:[#allocation2 + $0xc8] sm:$0xff]
    %v422 = vld [vmem:[#allocation2 + $0xd0] sm:$0xff]
    %v423 = vld [vmem:[#allocation2 + $0xd8] sm:$0xff]
    %v424 = vld [vmem:[#allocation2 + $0xe0] sm:$0xff]
    %v425 = vld [vmem:[#allocation2 + $0xe8] sm:$0xff]
    %v426 = vld [vmem:[#allocation2 + $0xf0] sm:$0xff]
    %v427 = vld [vmem:[#allocation2 + $0xf8] sm:$0xff]
    %v428 = vld [vmem:[#allocation2 + $0x100] sm:$0xff]
    %v429 = vld [vmem:[#allocation2 + $0x108] sm:$0xff]
    %v430 = vld [vmem:[#allocation2 + $0x110] sm:$0xff]
    %v431 = vld [vmem:[#allocation2 + $0x118] sm:$0xff]
    %v432 = vld [vmem:[#allocation2 + $0x120] sm:$0xff]
    %v433 = vld [vmem:[#allocation2 + $0x128] sm:$0xff]
    %v434 = vld [vmem:[#allocation2 + $0x130] sm:$0xff]
    %v435 = vld [vmem:[#allocation2 + $0x138] sm:$0xff]
    %v436 = vld [vmem:[#allocation2 + $0x140] sm:$0xff]
    %v437 = vld [vmem:[#allocation2 + $0x148] sm:$0xff]
    %v438 = vld [vmem:[#allocation2 + $0x150] sm:$0xff]
    %v439 = vld [vmem:[#allocation2 + $0x158] sm:$0xff]
    %v440 = vld [vmem:[#allocation2 + $0x160] sm:$0xff]
    %v441 = vld [vmem:[#allocation2 + $0x168] sm:$0xff]
    %v442 = vld [vmem:[#allocation2 + $0x170] sm:$0xff]
    %v443 = vld [vmem:[#allocation2 + $0x178] sm:$0xff]
    %v444 = vld [vmem:[#allocation2 + $0x180] sm:$0xff]
    %v445 = vld [vmem:[#allocation2 + $0x188] sm:$0xff]
    %v446 = vld [vmem:[#allocation2 + $0x190] sm:$0xff]
    %v447 = vld [vmem:[#allocation2 + $0x198] sm:$0xff]
    %v448 = vld [vmem:[#allocation2 + $0x1a0] sm:$0xff]
    %v449 = vld [vmem:[#allocation2 + $0x1a8] sm:$0xff]
    %v450 = vld [vmem:[#allocation2 + $0x1b0] sm:$0xff]
    %v451 = vld [vmem:[#allocation2 + $0x1b8] sm:$0xff]
    %v452 = vld [vmem:[#allocation2 + $0x1c0] sm:$0xff]
    %v453 = vld [vmem:[#allocation2 + $0x1c8] sm:$0xff]
    %v454 = vld [vmem:[#allocation2 + $0x1d0] sm:$0xff]
    %v455 = vld [vmem:[#allocation2 + $0x1d8] sm:$0xff]
    %v456 = vld [vmem:[#allocation2 + $0x1e0] sm:$0xff]
    %v457 = vld [vmem:[#allocation2 + $0x1e8] sm:$0xff]
    %v458 = vld [vmem:[#allocation2 + $0x1f0] sm:$0xff]
    %v459 = vld [vmem:[#allocation2 + $0x1f8] sm:$0xff]
    %v460 = vld [vmem:[#allocation2 + $0x200] sm:$0xff]
    %v461 = vld [vmem:[#allocation2 + $0x208] sm:$0xff]
    %v462 = vld [vmem:[#allocation2 + $0x210] sm:$0xff]
    %v463 = vld [vmem:[#allocation2 + $0x218] sm:$0xff]
    %v464 = vld [vmem:[#allocation2 + $0x220] sm:$0xff]
    %v465 = vld [vmem:[#allocation2 + $0x228] sm:$0xff]
    %v466 = vld [vmem:[#allocation2 + $0x230] sm:$0xff]
    %v467 = vld [vmem:[#allocation2 + $0x238] sm:$0xff]
    %v468 = vld [vmem:[#allocation2 + $0x240] sm:$0xff]
    %v469 = vld [vmem:[#allocation2 + $0x248] sm:$0xff]
    %v470 = vld [vmem:[#allocation2 + $0x250] sm:$0xff]
    %v471 = vld [vmem:[#allocation2 + $0x258] sm:$0xff]
    %v472 = vld [vmem:[#allocation2 + $0x260] sm:$0xff]
    %v473 = vld [vmem:[#allocation2 + $0x268] sm:$0xff]
    %v474 = vld [vmem:[#allocation2 + $0x270] sm:$0xff]
    %v475 = vld [vmem:[#allocation2 + $0x278] sm:$0xff]
    %v476 = vld [vmem:[#allocation2 + $0x280] sm:$0xff]
    %v477 = vld [vmem:[#allocation2 + $0x288] sm:$0xff]
    %v478 = vld [vmem:[#allocation2 + $0x290] sm:$0xff]
    %v479 = vld [vmem:[#allocation2 + $0x298] sm:$0xff]
    %v480 = vld [vmem:[#allocation2 + $0x2a0] sm:$0xff]
    %v481 = vld [vmem:[#allocation2 + $0x2a8] sm:$0xff]
    %v482 = vld [vmem:[#allocation2 + $0x2b0] sm:$0xff]
    %v483 = vld [vmem:[#allocation2 + $0x2b8] sm:$0xff]
    %v484 = vld [vmem:[#allocation2 + $0x2c0] sm:$0xff]
    %v485 = vld [vmem:[#allocation2 + $0x2c8] sm:$0xff]
    %v486 = vld [vmem:[#allocation2 + $0x2d0] sm:$0xff]
    %v487 = vld [vmem:[#allocation2 + $0x2d8] sm:$0xff]
    %v488 = vld [vmem:[#allocation2 + $0x2e0] sm:$0xff]
    %v489 = vld [vmem:[#allocation2 + $0x2e8] sm:$0xff]
    %v490 = vld [vmem:[#allocation2 + $0x2f0] sm:$0xff]
    %v491 = vld [vmem:[#allocation2 + $0x2f8] sm:$0xff]
    %v492 = vld [vmem:[#allocation2 + $0x300] sm:$0xff]
    %v493 = vld [vmem:[#allocation2 + $0x308] sm:$0xff]
    %v494 = vld [vmem:[#allocation2 + $0x310] sm:$0xff]
    %v495 = vld [vmem:[#allocation2 + $0x318] sm:$0xff]
    %v497 = vlaneseq
    %v498 = vshrl.u32 %v497, 7
    %v499 = vsub.s32 0, %v498
    %v500 = vrot.slane %v77, %v499
    %v501 = vlaneseq
    %v502 = vshrl.u32 %v501, 7
    %v503 = vsub.s32 1, %v502
    %v504 = vrot.slane %v77, %v503
    %v505 = vlaneseq
    %v506 = vshrl.u32 %v505, 7
    %v507 = vsub.s32 2, %v506
    %v508 = vrot.slane %v77, %v507
    %v509 = vlaneseq
    %v510 = vshrl.u32 %v509, 7
    %v511 = vsub.s32 3, %v510
    %v512 = vrot.slane %v77, %v511
    %v617 = vunpack.c.l.b16 %v396
    %v618 = vunpack.c.h.b16 %v396
    %v619 = vunpack.c.l.b16 %v397
    %v620 = vunpack.c.h.b16 %v397
    %v621 = vunpack.c.l.b16 %v398
    %v622 = vunpack.c.h.b16 %v398
    %v623 = vunpack.c.l.b16 %v399
    %v624 = vunpack.c.h.b16 %v399
    %v625 = vunpack.c.l.b16 %v400
    %v626 = vunpack.c.h.b16 %v400
    %v627 = vunpack.c.l.b16 %v401
    %v628 = vunpack.c.h.b16 %v401
    %v629 = vunpack.c.l.b16 %v402
    %v630 = vunpack.c.h.b16 %v402
    %v631 = vunpack.c.l.b16 %v403
    %v632 = vunpack.c.h.b16 %v403
    %v633 = vunpack.c.l.b16 %v404
    %v634 = vunpack.c.h.b16 %v404
    %v635 = vunpack.c.l.b16 %v405
    %v636 = vunpack.c.h.b16 %v405
    %v637 = vunpack.c.l.b16 %v406
    %v638 = vunpack.c.h.b16 %v406
    %v639 = vunpack.c.l.b16 %v407
    %v640 = vunpack.c.h.b16 %v407
    %v641 = vunpack.c.l.b16 %v408
    %v642 = vunpack.c.h.b16 %v408
    %v643 = vunpack.c.l.b16 %v409
    %v644 = vunpack.c.h.b16 %v409
    %v645 = vunpack.c.l.b16 %v410
    %v646 = vunpack.c.h.b16 %v410
    %v647 = vunpack.c.l.b16 %v411
    %v648 = vunpack.c.h.b16 %v411
    %v649 = vunpack.c.l.b16 %v412
    %v650 = vunpack.c.h.b16 %v412
    %v651 = vunpack.c.l.b16 %v413
    %v652 = vunpack.c.h.b16 %v413
    %v653 = vunpack.c.l.b16 %v414
    %v654 = vunpack.c.h.b16 %v414
    %v655 = vunpack.c.l.b16 %v415
    %v656 = vunpack.c.h.b16 %v415
    %v657 = vunpack.c.l.b16 %v416
    %v658 = vunpack.c.h.b16 %v416
    %v659 = vunpack.c.l.b16 %v417
    %v660 = vunpack.c.h.b16 %v417
    %v661 = vunpack.c.l.b16 %v418
    %v662 = vunpack.c.h.b16 %v418
    %v663 = vunpack.c.l.b16 %v419
    %v664 = vunpack.c.h.b16 %v419
    %v665 = vunpack.c.l.b16 %v420
    %v666 = vunpack.c.h.b16 %v420
    %v667 = vunpack.c.l.b16 %v421
    %v668 = vunpack.c.h.b16 %v421
    %v669 = vunpack.c.l.b16 %v422
    %v670 = vunpack.c.h.b16 %v422
    %v671 = vunpack.c.l.b16 %v423
    %v672 = vunpack.c.h.b16 %v423
    %v673 = vunpack.c.l.b16 %v424
    %v674 = vunpack.c.h.b16 %v424
    %v675 = vunpack.c.l.b16 %v425
    %v676 = vunpack.c.h.b16 %v425
    %v677 = vunpack.c.l.b16 %v426
    %v678 = vunpack.c.h.b16 %v426
    %v679 = vunpack.c.l.b16 %v427
    %v680 = vunpack.c.h.b16 %v427
    %v681 = vunpack.c.l.b16 %v428
    %v682 = vunpack.c.h.b16 %v428
    %v683 = vunpack.c.l.b16 %v429
    %v684 = vunpack.c.h.b16 %v429
    %v685 = vunpack.c.l.b16 %v430
    %v686 = vunpack.c.h.b16 %v430
    %v687 = vunpack.c.l.b16 %v431
    %v688 = vunpack.c.h.b16 %v431
    %v689 = vunpack.c.l.b16 %v432
    %v690 = vunpack.c.h.b16 %v432
    %v691 = vunpack.c.l.b16 %v433
    %v692 = vunpack.c.h.b16 %v433
    %v693 = vunpack.c.l.b16 %v434
    %v694 = vunpack.c.h.b16 %v434
    %v695 = vunpack.c.l.b16 %v435
    %v696 = vunpack.c.h.b16 %v435
    %v697 = vunpack.c.l.b16 %v436
    %v698 = vunpack.c.h.b16 %v436
    %v699 = vunpack.c.l.b16 %v437
    %v700 = vunpack.c.h.b16 %v437
    %v701 = vunpack.c.l.b16 %v438
    %v702 = vunpack.c.h.b16 %v438
    %v703 = vunpack.c.l.b16 %v439
    %v704 = vunpack.c.h.b16 %v439
    %v705 = vunpack.c.l.b16 %v440
    %v706 = vunpack.c.h.b16 %v440
    %v707 = vunpack.c.l.b16 %v441
    %v708 = vunpack.c.h.b16 %v441
    %v709 = vunpack.c.l.b16 %v442
    %v710 = vunpack.c.h.b16 %v442
    %v711 = vunpack.c.l.b16 %v443
    %v712 = vunpack.c.h.b16 %v443
    %v713 = vunpack.c.l.b16 %v444
    %v714 = vunpack.c.h.b16 %v444
    %v715 = vunpack.c.l.b16 %v445
    %v716 = vunpack.c.h.b16 %v445
    %v717 = vunpack.c.l.b16 %v446
    %v718 = vunpack.c.h.b16 %v446
    %v719 = vunpack.c.l.b16 %v447
    %v720 = vunpack.c.h.b16 %v447
    %v721 = vunpack.c.l.b16 %v448
    %v722 = vunpack.c.h.b16 %v448
    %v723 = vunpack.c.l.b16 %v449
    %v724 = vunpack.c.h.b16 %v449
    %v725 = vunpack.c.l.b16 %v450
    %v726 = vunpack.c.h.b16 %v450
    %v727 = vunpack.c.l.b16 %v451
    %v728 = vunpack.c.h.b16 %v451
    %v729 = vunpack.c.l.b16 %v452
    %v730 = vunpack.c.h.b16 %v452
    %v731 = vunpack.c.l.b16 %v453
    %v732 = vunpack.c.h.b16 %v453
    %v733 = vunpack.c.l.b16 %v454
    %v734 = vunpack.c.h.b16 %v454
    %v735 = vunpack.c.l.b16 %v455
    %v736 = vunpack.c.h.b16 %v455
    %v737 = vunpack.c.l.b16 %v456
    %v738 = vunpack.c.h.b16 %v456
    %v739 = vunpack.c.l.b16 %v457
    %v740 = vunpack.c.h.b16 %v457
    %v741 = vunpack.c.l.b16 %v458
    %v742 = vunpack.c.h.b16 %v458
    %v743 = vunpack.c.l.b16 %v459
    %v744 = vunpack.c.h.b16 %v459
    %v745 = vunpack.c.l.b16 %v460
    %v746 = vunpack.c.h.b16 %v460
    %v747 = vunpack.c.l.b16 %v461
    %v748 = vunpack.c.h.b16 %v461
    %v749 = vunpack.c.l.b16 %v462
    %v750 = vunpack.c.h.b16 %v462
    %v751 = vunpack.c.l.b16 %v463
    %v752 = vunpack.c.h.b16 %v463
    %v753 = vunpack.c.l.b16 %v464
    %v754 = vunpack.c.h.b16 %v464
    %v755 = vunpack.c.l.b16 %v465
    %v756 = vunpack.c.h.b16 %v465
    %v757 = vunpack.c.l.b16 %v466
    %v758 = vunpack.c.h.b16 %v466
    %v759 = vunpack.c.l.b16 %v467
    %v760 = vunpack.c.h.b16 %v467
    %v761 = vunpack.c.l.b16 %v468
    %v762 = vunpack.c.h.b16 %v468
    %v763 = vunpack.c.l.b16 %v469
    %v764 = vunpack.c.h.b16 %v469
    %v765 = vunpack.c.l.b16 %v470
    %v766 = vunpack.c.h.b16 %v470
    %v767 = vunpack.c.l.b16 %v471
    %v768 = vunpack.c.h.b16 %v471
    %v769 = vunpack.c.l.b16 %v472
    %v770 = vunpack.c.h.b16 %v472
    %v771 = vunpack.c.l.b16 %v473
    %v772 = vunpack.c.h.b16 %v473
    %v773 = vunpack.c.l.b16 %v474
    %v774 = vunpack.c.h.b16 %v474
    %v775 = vunpack.c.l.b16 %v475
    %v776 = vunpack.c.h.b16 %v475
    %v777 = vunpack.c.l.b16 %v476
    %v778 = vunpack.c.h.b16 %v476
    %v779 = vunpack.c.l.b16 %v477
    %v780 = vunpack.c.h.b16 %v477
    %v781 = vunpack.c.l.b16 %v478
    %v782 = vunpack.c.h.b16 %v478
    %v783 = vunpack.c.l.b16 %v479
    %v784 = vunpack.c.h.b16 %v479
    %v785 = vunpack.c.l.b16 %v480
    %v786 = vunpack.c.h.b16 %v480
    %v787 = vunpack.c.l.b16 %v481
    %v788 = vunpack.c.h.b16 %v481
    %v789 = vunpack.c.l.b16 %v482
    %v790 = vunpack.c.h.b16 %v482
    %v791 = vunpack.c.l.b16 %v483
    %v792 = vunpack.c.h.b16 %v483
    %v793 = vunpack.c.l.b16 %v484
    %v794 = vunpack.c.h.b16 %v484
    %v795 = vunpack.c.l.b16 %v485
    %v796 = vunpack.c.h.b16 %v485
    %v797 = vunpack.c.l.b16 %v486
    %v798 = vunpack.c.h.b16 %v486
    %v799 = vunpack.c.l.b16 %v487
    %v800 = vunpack.c.h.b16 %v487
    %v801 = vunpack.c.l.b16 %v488
    %v802 = vunpack.c.h.b16 %v488
    %v803 = vunpack.c.l.b16 %v489
    %v804 = vunpack.c.h.b16 %v489
    %v805 = vunpack.c.l.b16 %v490
    %v806 = vunpack.c.h.b16 %v490
    %v807 = vunpack.c.l.b16 %v491
    %v808 = vunpack.c.h.b16 %v491
    %v809 = vunpack.c.l.b16 %v492
    %v810 = vunpack.c.h.b16 %v492
    %v811 = vunpack.c.l.b16 %v493
    %v812 = vunpack.c.h.b16 %v493
    %v813 = vunpack.c.l.b16 %v494
    %v814 = vunpack.c.h.b16 %v494
    %v815 = vunpack.c.l.b16 %v495
    %v816 = vunpack.c.h.b16 %v495
    %v817 = vpack.c.b16 %v621, %v617
    %v818 = vpack.c.b16 %v622, %v618
    %v819 = vpack.c.b16 %v623, %v619
    %v820 = vpack.c.b16 %v624, %v620
    %v821 = vpack.c.b16 %v629, %v625
    %v822 = vpack.c.b16 %v630, %v626
    %v823 = vpack.c.b16 %v631, %v627
    %v824 = vpack.c.b16 %v632, %v628
    %v825 = vpack.c.b16 %v637, %v633
    %v826 = vpack.c.b16 %v638, %v634
    %v827 = vpack.c.b16 %v639, %v635
    %v828 = vpack.c.b16 %v640, %v636
    %v829 = vpack.c.b16 %v645, %v641
    %v830 = vpack.c.b16 %v646, %v642
    %v831 = vpack.c.b16 %v647, %v643
    %v832 = vpack.c.b16 %v648, %v644
    %v833 = vpack.c.b16 %v653, %v649
    %v834 = vpack.c.b16 %v654, %v650
    %v835 = vpack.c.b16 %v655, %v651
    %v836 = vpack.c.b16 %v656, %v652
    %v837 = vpack.c.b16 %v661, %v657
    %v838 = vpack.c.b16 %v662, %v658
    %v839 = vpack.c.b16 %v663, %v659
    %v840 = vpack.c.b16 %v664, %v660
    %v841 = vpack.c.b16 %v669, %v665
    %v842 = vpack.c.b16 %v670, %v666
    %v843 = vpack.c.b16 %v671, %v667
    %v844 = vpack.c.b16 %v672, %v668
    %v845 = vpack.c.b16 %v677, %v673
    %v846 = vpack.c.b16 %v678, %v674
    %v847 = vpack.c.b16 %v679, %v675
    %v848 = vpack.c.b16 %v680, %v676
    %v849 = vpack.c.b16 %v685, %v681
    %v850 = vpack.c.b16 %v686, %v682
    %v851 = vpack.c.b16 %v687, %v683
    %v852 = vpack.c.b16 %v688, %v684
    %v853 = vpack.c.b16 %v693, %v689
    %v854 = vpack.c.b16 %v694, %v690
    %v855 = vpack.c.b16 %v695, %v691
    %v856 = vpack.c.b16 %v696, %v692
    %v857 = vpack.c.b16 %v701, %v697
    %v858 = vpack.c.b16 %v702, %v698
    %v859 = vpack.c.b16 %v703, %v699
    %v860 = vpack.c.b16 %v704, %v700
    %v861 = vpack.c.b16 %v709, %v705
    %v862 = vpack.c.b16 %v710, %v706
    %v863 = vpack.c.b16 %v711, %v707
    %v864 = vpack.c.b16 %v712, %v708
    %v865 = vpack.c.b16 %v717, %v713
    %v866 = vpack.c.b16 %v718, %v714
    %v867 = vpack.c.b16 %v719, %v715
    %v868 = vpack.c.b16 %v720, %v716
    %v869 = vpack.c.b16 %v725, %v721
    %v870 = vpack.c.b16 %v726, %v722
    %v871 = vpack.c.b16 %v727, %v723
    %v872 = vpack.c.b16 %v728, %v724
    %v873 = vpack.c.b16 %v733, %v729
    %v874 = vpack.c.b16 %v734, %v730
    %v875 = vpack.c.b16 %v735, %v731
    %v876 = vpack.c.b16 %v736, %v732
    %v877 = vpack.c.b16 %v741, %v737
    %v878 = vpack.c.b16 %v742, %v738
    %v879 = vpack.c.b16 %v743, %v739
    %v880 = vpack.c.b16 %v744, %v740
    %v881 = vpack.c.b16 %v749, %v745
    %v882 = vpack.c.b16 %v750, %v746
    %v883 = vpack.c.b16 %v751, %v747
    %v884 = vpack.c.b16 %v752, %v748
    %v885 = vpack.c.b16 %v757, %v753
    %v886 = vpack.c.b16 %v758, %v754
    %v887 = vpack.c.b16 %v759, %v755
    %v888 = vpack.c.b16 %v760, %v756
    %v889 = vpack.c.b16 %v765, %v761
    %v890 = vpack.c.b16 %v766, %v762
    %v891 = vpack.c.b16 %v767, %v763
    %v892 = vpack.c.b16 %v768, %v764
    %v893 = vpack.c.b16 %v773, %v769
    %v894 = vpack.c.b16 %v774, %v770
    %v895 = vpack.c.b16 %v775, %v771
    %v896 = vpack.c.b16 %v776, %v772
    %v897 = vpack.c.b16 %v781, %v777
    %v898 = vpack.c.b16 %v782, %v778
    %v899 = vpack.c.b16 %v783, %v779
    %v900 = vpack.c.b16 %v784, %v780
    %v901 = vpack.c.b16 %v789, %v785
    %v902 = vpack.c.b16 %v790, %v786
    %v903 = vpack.c.b16 %v791, %v787
    %v904 = vpack.c.b16 %v792, %v788
    %v905 = vpack.c.b16 %v797, %v793
    %v906 = vpack.c.b16 %v798, %v794
    %v907 = vpack.c.b16 %v799, %v795
    %v908 = vpack.c.b16 %v800, %v796
    %v909 = vpack.c.b16 %v805, %v801
    %v910 = vpack.c.b16 %v806, %v802
    %v911 = vpack.c.b16 %v807, %v803
    %v912 = vpack.c.b16 %v808, %v804
    %v913 = vpack.c.b16 %v813, %v809
    %v914 = vpack.c.b16 %v814, %v810
    %v915 = vpack.c.b16 %v815, %v811
    %v916 = vpack.c.b16 %v816, %v812
    %vm1017 = vcmask 130048
    %v1019 = vsel %vm1017, %v395, 0
    %1021 = vmatprep.subr.bf16.mxu0 %v818
    %1022 = vmatpush1.bf16.msra.mxu0 %v817
    %1023 = vmatprep.subr.bf16.mxu0 %v822
    %1024 = vmatpush1.bf16.msra.mxu0 %v821
    %1025 = vmatprep.subr.bf16.mxu0 %v826
    %1026 = vmatpush1.bf16.msra.mxu0 %v825
    %1027 = vmatprep.subr.bf16.mxu0 %v830
    %1028 = vmatpush1.bf16.msra.mxu0 %v829
    %1029 = vmatprep.subr.bf16.mxu0 %v834
    %1030 = vmatpush1.bf16.msra.mxu0 %v833
    %1031 = vmatprep.subr.bf16.mxu0 %v838
    %1032 = vmatpush1.bf16.msra.mxu0 %v837
    %1033 = vmatprep.subr.bf16.mxu0 %v842
    %1034 = vmatpush1.bf16.msra.mxu0 %v841
    %1035 = vmatprep.subr.bf16.mxu0 %v846
    %1036 = vmatpush1.bf16.msra.mxu0 %v845
    %1037 = vmatprep.subr.bf16.mxu0 %v850
    %1038 = vmatpush1.bf16.msra.mxu0 %v849
    %1039 = vmatprep.subr.bf16.mxu0 %v854
    %1040 = vmatpush1.bf16.msra.mxu0 %v853
    %1041 = vmatprep.subr.bf16.mxu0 %v858
    %1042 = vmatpush1.bf16.msra.mxu0 %v857
    %1043 = vmatprep.subr.bf16.mxu0 %v862
    %1044 = vmatpush1.bf16.msra.mxu0 %v861
    %1045 = vmatprep.subr.bf16.mxu0 %v866
    %1046 = vmatpush1.bf16.msra.mxu0 %v865
    %1047 = vmatprep.subr.bf16.mxu0 %v870
    %1048 = vmatpush1.bf16.msra.mxu0 %v869
    %1049 = vmatprep.subr.bf16.mxu0 %v874
    %1050 = vmatpush1.bf16.msra.mxu0 %v873
    %1051 = vmatprep.subr.bf16.mxu0 %v878
    %1052 = vmatpush1.bf16.msra.mxu0 %v877
    %1053 = vmatprep.mubr.bf16.mxu0 %v393
    %1054 = vmatmul.mubr.bf16.gmra.mrb[0].mxu0 %v392
    %v1055 = vpop.f32.mrb[0].mxu0
    %v1056 = vadd.f32 %v500, %v1055
    %v1057 = vpop.f32.mrb[0].mxu0
    %v1058 = vadd.f32 %v504, %v1057
    %v1059 = vpop.f32.mrb[0].mxu0
    %v1060 = vpop.f32.mrb[0].mxu0
    %1061 = vdwg.mxu0
    %1062 = vmatprep.subr.bf16.mxu0 %v882
    %1063 = vmatpush1.bf16.msra.mxu0 %v881
    %1064 = vmatprep.subr.bf16.mxu0 %v886
    %1065 = vmatpush1.bf16.msra.mxu0 %v885
    %1066 = vmatprep.subr.bf16.mxu0 %v890
    %1067 = vmatpush1.bf16.msra.mxu0 %v889
    %1068 = vmatprep.subr.bf16.mxu0 %v894
    %1069 = vmatpush1.bf16.msra.mxu0 %v893
    %1070 = vmatprep.subr.bf16.mxu0 %v898
    %1071 = vmatpush1.bf16.msra.mxu0 %v897
    %1072 = vmatprep.subr.bf16.mxu0 %v902
    %1073 = vmatpush1.bf16.msra.mxu0 %v901
    %1074 = vmatprep.subr.bf16.mxu0 %v906
    %1075 = vmatpush1.bf16.msra.mxu0 %v905
    %1076 = vmatprep.subr.bf16.mxu0 %v910
    %1077 = vmatpush1.bf16.msra.mxu0 %v909
    %1078 = vmatprep.subr.bf16.mxu0 %v914
    %1079 = vmatpush1.bf16.msra.mxu0 %v913
    %1080 = vmatprep.subr.bf16.mxu0 0
    %1081 = vmatpush1.bf16.msra.mxu0 0
    %1082 = vmatprep.subr.bf16.mxu0 0
    %1083 = vmatpush1.bf16.msra.mxu0 0
    %1084 = vmatprep.subr.bf16.mxu0 0
    %1085 = vmatpush1.bf16.msra.mxu0 0
    %1086 = vmatprep.subr.bf16.mxu0 0
    %1087 = vmatpush1.bf16.msra.mxu0 0
    %1088 = vmatprep.subr.bf16.mxu0 0
    %1089 = vmatpush1.bf16.msra.mxu0 0
    %1090 = vmatprep.subr.bf16.mxu0 0
    %1091 = vmatpush1.bf16.msra.mxu0 0
    %1092 = vmatprep.subr.bf16.mxu0 0
    %1093 = vmatpush1.bf16.msra.mxu0 0
    %1094 = vmatprep.mubr.bf16.mxu0 %v1019
    %1095 = vmatmul.mubr.bf16.gmra.mrb[0].mxu0 %v394
    %v1096 = vpop.f32.mrb[0].mxu0
    %v1097 = vadd.f32 %v1056, %v1096
    %v1098 = vpop.f32.mrb[0].mxu0
    %v1099 = vadd.f32 %v1058, %v1098
    %v1100 = vpop.f32.mrb[0].mxu0
    %v1101 = vpop.f32.mrb[0].mxu0
    %1102 = vdwg.mxu0
    %1103 = vmatprep.subr.bf16.mxu0 %v820
    %1104 = vmatpush1.bf16.msra.mxu0 %v819
    %1105 = vmatprep.subr.bf16.mxu0 %v824
    %1106 = vmatpush1.bf16.msra.mxu0 %v823
    %1107 = vmatprep.subr.bf16.mxu0 %v828
    %1108 = vmatpush1.bf16.msra.mxu0 %v827
    %1109 = vmatprep.subr.bf16.mxu0 %v832
    %1110 = vmatpush1.bf16.msra.mxu0 %v831
    %1111 = vmatprep.subr.bf16.mxu0 %v836
    %1112 = vmatpush1.bf16.msra.mxu0 %v835
    %1113 = vmatprep.subr.bf16.mxu0 %v840
    %1114 = vmatpush1.bf16.msra.mxu0 %v839
    %1115 = vmatprep.subr.bf16.mxu0 %v844
    %1116 = vmatpush1.bf16.msra.mxu0 %v843
    %1117 = vmatprep.subr.bf16.mxu0 %v848
    %1118 = vmatpush1.bf16.msra.mxu0 %v847
    %1119 = vmatprep.subr.bf16.mxu0 %v852
    %1120 = vmatpush1.bf16.msra.mxu0 %v851
    %1121 = vmatprep.subr.bf16.mxu0 %v856
    %1122 = vmatpush1.bf16.msra.mxu0 %v855
    %1123 = vmatprep.subr.bf16.mxu0 %v860
    %1124 = vmatpush1.bf16.msra.mxu0 %v859
    %1125 = vmatprep.subr.bf16.mxu0 %v864
    %1126 = vmatpush1.bf16.msra.mxu0 %v863
    %1127 = vmatprep.subr.bf16.mxu0 %v868
    %1128 = vmatpush1.bf16.msra.mxu0 %v867
    %1129 = vmatprep.subr.bf16.mxu0 %v872
    %1130 = vmatpush1.bf16.msra.mxu0 %v871
    %1131 = vmatprep.subr.bf16.mxu0 %v876
    %1132 = vmatpush1.bf16.msra.mxu0 %v875
    %1133 = vmatprep.subr.bf16.mxu0 %v880
    %1134 = vmatpush1.bf16.msra.mxu0 %v879
    %1135 = vmatprep.mubr.bf16.mxu0 %v393
    %1136 = vmatmul.mubr.bf16.gmra.mrb[0].mxu0 %v392
    %v1137 = vpop.f32.mrb[0].mxu0
    %v1138 = vadd.f32 %v508, %v1137
    %v1139 = vpop.f32.mrb[0].mxu0
    %v1140 = vadd.f32 %v512, %v1139
    %v1141 = vpop.f32.mrb[0].mxu0
    %v1142 = vpop.f32.mrb[0].mxu0
    %1143 = vdwg.mxu0
    %1144 = vmatprep.subr.bf16.mxu0 %v884
    %1145 = vmatpush1.bf16.msra.mxu0 %v883
    %1146 = vmatprep.subr.bf16.mxu0 %v888
    %1147 = vmatpush1.bf16.msra.mxu0 %v887
    %1148 = vmatprep.subr.bf16.mxu0 %v892
    %1149 = vmatpush1.bf16.msra.mxu0 %v891
    %1150 = vmatprep.subr.bf16.mxu0 %v896
    %1151 = vmatpush1.bf16.msra.mxu0 %v895
    %1152 = vmatprep.subr.bf16.mxu0 %v900
    %1153 = vmatpush1.bf16.msra.mxu0 %v899
    %1154 = vmatprep.subr.bf16.mxu0 %v904
    %1155 = vmatpush1.bf16.msra.mxu0 %v903
    %1156 = vmatprep.subr.bf16.mxu0 %v908
    %1157 = vmatpush1.bf16.msra.mxu0 %v907
    %1158 = vmatprep.subr.bf16.mxu0 %v912
    %1159 = vmatpush1.bf16.msra.mxu0 %v911
    %1160 = vmatprep.subr.bf16.mxu0 %v916
    %1161 = vmatpush1.bf16.msra.mxu0 %v915
    %1162 = vmatprep.subr.bf16.mxu0 0
    %1163 = vmatpush1.bf16.msra.mxu0 0
    %1164 = vmatprep.subr.bf16.mxu0 0
    %1165 = vmatpush1.bf16.msra.mxu0 0
    %1166 = vmatprep.subr.bf16.mxu0 0
    %1167 = vmatpush1.bf16.msra.mxu0 0
    %1168 = vmatprep.subr.bf16.mxu0 0
    %1169 = vmatpush1.bf16.msra.mxu0 0
    %1170 = vmatprep.subr.bf16.mxu0 0
    %1171 = vmatpush1.bf16.msra.mxu0 0
    %1172 = vmatprep.subr.bf16.mxu0 0
    %1173 = vmatpush1.bf16.msra.mxu0 0
    %1174 = vmatprep.subr.bf16.mxu0 0
    %1175 = vmatpush1.bf16.msra.mxu0 0
    %1176 = vmatprep.mubr.bf16.mxu0 %v1019
    %1177 = vmatmul.mubr.bf16.gmra.mrb[0].mxu0 %v394
    %v1178 = vpop.f32.mrb[0].mxu0
    %v1179 = vadd.f32 %v1138, %v1178
    %v1180 = vpop.f32.mrb[0].mxu0
    %v1181 = vadd.f32 %v1140, %v1180
    %v1182 = vpop.f32.mrb[0].mxu0
    %v1183 = vpop.f32.mrb[0].mxu0
    %1184 = vdwg.mxu0
    %v1185 = vmax.f32 %v1097, 0.0
    %v1186 = vmax.f32 %v1099, 0.0
    %v1187 = vmax.f32 %v1179, 0.0
    %v1188 = vmax.f32 %v1181, 0.0
    %v1189 = vld [vmem:[%s1] sm:$0xff]
    %v1190 = vadd.f32 %v1185, %v1186
    %v1191 = vadd.f32 %v1190, %v1187
    %v1192 = vsel %vm1017, %v1188, 0.0
    %v1193 = vadd.f32 %v1191, %v1192
    %1194 = vadd.xlane.f32.xlu0 %v1193
    %v1195 = vpop.xlane.xlu0 %1194
    %vm1196 = vcmask 72704
    %v1197 = vsel %vm1196, %v1189, 0.0
    %1198 = vadd.xlane.f32.xlu0 %v1197
    %v1199 = vpop.xlane.xlu0 %1198
    %v1200 = vadd.f32 %v1195, %v1199
    %v1201 = vmul.f32 %v1185, %v1185
    %v1202 = vmul.f32 %v1186, %v1186
    %v1203 = vmul.f32 %v1187, %v1187
    %v1204 = vmul.f32 %v1188, %v1188
    %v1205 = vadd.f32 %v1201, %v1202
    %v1206 = vadd.f32 %v1205, %v1203
    %v1207 = vsel %vm1017, %v1204, 0.0
    %v1208 = vadd.f32 %v1206, %v1207
    %1209 = vadd.xlane.f32.xlu0 %v1208
    %v1210 = vpop.xlane.xlu0 %1209
    %v1211 = vmul.f32 %v1189, %v1189
    %v1212 = vsel %vm1196, %v1211, 0.0
    %1213 = vadd.xlane.f32.xlu0 %v1212
    %v1214 = vpop.xlane.xlu0 %1213
    %v1215 = vadd.f32 %v1210, %v1214
    %v1216 = vmul.f32 %v1200, 0.002444988
    %v1217 = vmul.f32 %v1215, 0.002444988
    %v1218 = vmul.f32 %v1216, %v1216
    %v1219 = vsub.f32 %v1217, %v1218
    %v1220 = vadd.f32 %v1219, 1e-05
    %v1221 = vrsqrt.pop %v1220
    %v1222 = vsub.f32 %v1185, %v1216
    %v1223 = vsub.f32 %v1186, %v1216
    %v1224 = vsub.f32 %v1187, %v1216
    %v1225 = vsub.f32 %v1188, %v1216
    %v1226 = vmul.f32 %v1222, %v1221
    %v1227 = vmul.f32 %v1223, %v1221
    %v1228 = vmul.f32 %v1224, %v1221
    %v1229 = vmul.f32 %v1225, %v1221
    %v1230 = vsub.f32 %v1189, %v1216
    %v1231 = vmul.f32 %v1230, %v1221
    %v1232 = vpack.c.bf16 %v1226, %v1226
    %v1233 = vpack.c.bf16 %v1227, %v1227
    %v1234 = vpack.c.bf16 %v1228, %v1228
    %v1235 = vpack.c.bf16 %v1229, %v1229
    %v1236 = vld [vmem:[#allocation5] sm:$0xff]
    %v1237 = vld [vmem:[#allocation5 + $0x8] sm:$0xff]
    %v1238 = vld [vmem:[#allocation5 + $0x10] sm:$0xff]
    %v1239 = vld [vmem:[#allocation5 + $0x18] sm:$0xff]
    %v1240 = vld [vmem:[#allocation5 + $0x20] sm:$0xff]
    %v1241 = vld [vmem:[#allocation5 + $0x28] sm:$0xff]
    %v1242 = vld [vmem:[#allocation5 + $0x30] sm:$0xff]
    %v1243 = vld [vmem:[#allocation5 + $0x38] sm:$0xff]
    %v1244 = vld [vmem:[#allocation5 + $0x40] sm:$0xff]
    %v1245 = vld [vmem:[#allocation5 + $0x48] sm:$0xff]
    %v1246 = vld [vmem:[#allocation5 + $0x50] sm:$0xff]
    %v1247 = vld [vmem:[#allocation5 + $0x58] sm:$0xff]
    %v1248 = vld [vmem:[#allocation5 + $0x60] sm:$0xff]
    %v1249 = vld [vmem:[#allocation5 + $0x68] sm:$0xff]
    %v1250 = vld [vmem:[#allocation5 + $0x70] sm:$0xff]
    %v1251 = vld [vmem:[#allocation5 + $0x78] sm:$0xff]
    %v1252 = vld [vmem:[#allocation5 + $0x80] sm:$0xff]
    %v1253 = vld [vmem:[#allocation5 + $0x88] sm:$0xff]
    %v1254 = vld [vmem:[#allocation5 + $0x90] sm:$0xff]
    %v1255 = vld [vmem:[#allocation5 + $0x98] sm:$0xff]
    %v1256 = vld [vmem:[#allocation5 + $0xa0] sm:$0xff]
    %v1257 = vld [vmem:[#allocation5 + $0xa8] sm:$0xff]
    %v1258 = vld [vmem:[#allocation5 + $0xb0] sm:$0xff]
    %v1259 = vld [vmem:[#allocation5 + $0xb8] sm:$0xff]
    %v1260 = vld [vmem:[#allocation5 + $0xc0] sm:$0xff]
    %v1261 = vld [vmem:[#allocation5 + $0xc8] sm:$0xff]
    %v1262 = vld [vmem:[#allocation5 + $0xd0] sm:$0xff]
    %v1263 = vld [vmem:[#allocation5 + $0xd8] sm:$0xff]
    %v1264 = vld [vmem:[#allocation5 + $0xe0] sm:$0xff]
    %v1265 = vld [vmem:[#allocation5 + $0xe8] sm:$0xff]
    %v1266 = vld [vmem:[#allocation5 + $0xf0] sm:$0xff]
    %v1267 = vld [vmem:[#allocation5 + $0xf8] sm:$0xff]
    %v1268 = vld [vmem:[#allocation5 + $0x100] sm:$0xff]
    %v1269 = vld [vmem:[#allocation5 + $0x108] sm:$0xff]
    %v1270 = vld [vmem:[#allocation5 + $0x110] sm:$0xff]
    %v1271 = vld [vmem:[#allocation5 + $0x118] sm:$0xff]
    %v1272 = vld [vmem:[#allocation5 + $0x120] sm:$0xff]
    %v1273 = vld [vmem:[#allocation5 + $0x128] sm:$0xff]
    %v1274 = vld [vmem:[#allocation5 + $0x130] sm:$0xff]
    %v1275 = vld [vmem:[#allocation5 + $0x138] sm:$0xff]
    %v1276 = vld [vmem:[#allocation5 + $0x140] sm:$0xff]
    %v1277 = vld [vmem:[#allocation5 + $0x148] sm:$0xff]
    %v1278 = vld [vmem:[#allocation5 + $0x150] sm:$0xff]
    %v1279 = vld [vmem:[#allocation5 + $0x158] sm:$0xff]
    %v1280 = vld [vmem:[#allocation5 + $0x160] sm:$0xff]
    %v1281 = vld [vmem:[#allocation5 + $0x168] sm:$0xff]
    %v1282 = vld [vmem:[#allocation5 + $0x170] sm:$0xff]
    %v1283 = vld [vmem:[#allocation5 + $0x178] sm:$0xff]
    %v1284 = vld [vmem:[#allocation5 + $0x180] sm:$0xff]
    %v1285 = vld [vmem:[#allocation5 + $0x188] sm:$0xff]
    %v1286 = vld [vmem:[#allocation5 + $0x190] sm:$0xff]
    %v1287 = vld [vmem:[#allocation5 + $0x198] sm:$0xff]
    %v1288 = vld [vmem:[#allocation5 + $0x1a0] sm:$0xff]
    %v1289 = vld [vmem:[#allocation5 + $0x1a8] sm:$0xff]
    %v1290 = vld [vmem:[#allocation5 + $0x1b0] sm:$0xff]
    %v1291 = vld [vmem:[#allocation5 + $0x1b8] sm:$0xff]
    %v1292 = vld [vmem:[#allocation5 + $0x1c0] sm:$0xff]
    %v1293 = vld [vmem:[#allocation5 + $0x1c8] sm:$0xff]
    %v1294 = vld [vmem:[#allocation5 + $0x1d0] sm:$0xff]
    %v1295 = vld [vmem:[#allocation5 + $0x1d8] sm:$0xff]
    %v1296 = vld [vmem:[#allocation5 + $0x1e0] sm:$0xff]
    %v1297 = vld [vmem:[#allocation5 + $0x1e8] sm:$0xff]
    %v1298 = vld [vmem:[#allocation5 + $0x1f0] sm:$0xff]
    %v1299 = vld [vmem:[#allocation5 + $0x1f8] sm:$0xff]
    %v1300 = vld [vmem:[#allocation5 + $0x200] sm:$0xff]
    %v1301 = vld [vmem:[#allocation5 + $0x208] sm:$0xff]
    %v1302 = vld [vmem:[#allocation5 + $0x210] sm:$0xff]
    %v1303 = vld [vmem:[#allocation5 + $0x218] sm:$0xff]
    %v1304 = vld [vmem:[#allocation5 + $0x220] sm:$0xff]
    %v1305 = vld [vmem:[#allocation5 + $0x228] sm:$0xff]
    %v1306 = vld [vmem:[#allocation5 + $0x230] sm:$0xff]
    %v1307 = vld [vmem:[#allocation5 + $0x238] sm:$0xff]
    %v1308 = vld [vmem:[#allocation5 + $0x240] sm:$0xff]
    %v1309 = vld [vmem:[#allocation5 + $0x248] sm:$0xff]
    %v1310 = vld [vmem:[#allocation5 + $0x250] sm:$0xff]
    %v1311 = vld [vmem:[#allocation5 + $0x258] sm:$0xff]
    %v1312 = vld [vmem:[#allocation5 + $0x260] sm:$0xff]
    %v1313 = vld [vmem:[#allocation5 + $0x268] sm:$0xff]
    %v1314 = vld [vmem:[#allocation5 + $0x270] sm:$0xff]
    %v1315 = vld [vmem:[#allocation5 + $0x278] sm:$0xff]
    %v1316 = vld [vmem:[#allocation5 + $0x280] sm:$0xff]
    %v1317 = vld [vmem:[#allocation5 + $0x288] sm:$0xff]
    %v1318 = vld [vmem:[#allocation5 + $0x290] sm:$0xff]
    %v1319 = vld [vmem:[#allocation5 + $0x298] sm:$0xff]
    %v1320 = vld [vmem:[#allocation5 + $0x2a0] sm:$0xff]
    %v1321 = vld [vmem:[#allocation5 + $0x2a8] sm:$0xff]
    %v1322 = vld [vmem:[#allocation5 + $0x2b0] sm:$0xff]
    %v1323 = vld [vmem:[#allocation5 + $0x2b8] sm:$0xff]
    %v1324 = vld [vmem:[#allocation5 + $0x2c0] sm:$0xff]
    %v1325 = vld [vmem:[#allocation5 + $0x2c8] sm:$0xff]
    %v1326 = vld [vmem:[#allocation5 + $0x2d0] sm:$0xff]
    %v1327 = vld [vmem:[#allocation5 + $0x2d8] sm:$0xff]
    %v1328 = vld [vmem:[#allocation5 + $0x2e0] sm:$0xff]
    %v1329 = vld [vmem:[#allocation5 + $0x2e8] sm:$0xff]
    %v1330 = vld [vmem:[#allocation5 + $0x2f0] sm:$0xff]
    %v1331 = vld [vmem:[#allocation5 + $0x2f8] sm:$0xff]
    %v1332 = vld [vmem:[#allocation5 + $0x300] sm:$0xff]
    %v1333 = vld [vmem:[#allocation5 + $0x308] sm:$0xff]
    %v1334 = vld [vmem:[#allocation5 + $0x310] sm:$0xff]
    %v1335 = vld [vmem:[#allocation5 + $0x318] sm:$0xff]
    %v1336 = vld [vmem:[%s5] sm:$0xff]
    %v1337 = vld [vmem:[%s5 + $0x8] sm:$0xff]
    %v1338 = vld [vmem:[%s5 + $0x10] sm:$0xff]
    %v1339 = vld [vmem:[%s5 + $0x18] sm:$0xff]
    %v1340 = vld [vmem:[%s5 + $0x20] sm:$0x1]
    %v1341 = vld [vmem:[%s5 + $0x28] sm:$0x1]
    %v1342 = vld [vmem:[%s5 + $0x30] sm:$0x1]
    %v1343 = vld [vmem:[%s5 + $0x38] sm:$0x1]
    %v1345 = vsel %vm1196, %v1231, 0
    %vm1347 = vcmask 1040384
    %v1349 = vsel %vm1347, %v1340, 0
    %v1352 = vsel %vm1347, %v1341, 0
    %v1355 = vsel %vm1347, %v1342, 0
    %v1358 = vsel %vm1347, %v1343, 0
    %1360 = vmatprep.subr.mxu0 %v1337
    %1361 = vmatpush1.msra.mxu0 %v1336
    %1362 = vmatprep.subr.mxu0 %v1352
    %1363 = vmatpush1.msra.mxu0 %v1349
    %1364 = vmatprep.subr.mxu0 0.0
    %1365 = vmatpush1.msra.mxu0 0.0
    %1366 = vmatprep.subr.mxu0 0.0
    %1367 = vmatpush1.msra.mxu0 0.0
    %1368 = vmatprep.subr.mxu0 0.0
    %1369 = vmatpush1.msra.mxu0 0.0
    %1370 = vmatprep.subr.mxu0 0.0
    %1371 = vmatpush1.msra.mxu0 0.0
    %1372 = vmatprep.subr.mxu0 0.0
    %1373 = vmatpush1.msra.mxu0 0.0
    %1374 = vmatprep.subr.mxu0 0.0
    %1375 = vmatpush1.msra.mxu0 0.0
    %1376 = vmatprep.subr.mxu0 0.0
    %1377 = vmatpush1.msra.mxu0 0.0
    %1378 = vmatprep.subr.mxu0 0.0
    %1379 = vmatpush1.msra.mxu0 0.0
    %1380 = vmatprep.subr.mxu0 0.0
    %1381 = vmatpush1.msra.mxu0 0.0
    %1382 = vmatprep.subr.mxu0 0.0
    %1383 = vmatpush1.msra.mxu0 0.0
    %1384 = vmatprep.subr.mxu0 0.0
    %1385 = vmatpush1.msra.mxu0 0.0
    %1386 = vmatprep.subr.mxu0 0.0
    %1387 = vmatpush1.msra.mxu0 0.0
    %1388 = vmatprep.subr.mxu0 0.0
    %1389 = vmatpush1.msra.mxu0 0.0
    %1390 = vmatprep.subr.mxu0 0.0
    %1391 = vmatpush1.msra.mxu0 0.0
    %1392 = vmatprep.subr.mxu0 0.0
    %1393 = vmatpush1.msra.mxu0 0.0
    %1394 = vmatprep.subr.mxu0 0.0
    %1395 = vmatpush1.msra.mxu0 0.0
    %1396 = vmatprep.subr.mxu0 0.0
    %1397 = vmatpush1.msra.mxu0 0.0
    %1398 = vmatprep.subr.mxu0 0.0
    %1399 = vmatpush1.msra.mxu0 0.0
    %1400 = vmatprep.subr.mxu0 0.0
    %1401 = vmatpush1.msra.mxu0 0.0
    %1402 = vmatprep.subr.mxu0 0.0
    %1403 = vmatpush1.msra.mxu0 0.0
    %1404 = vmatprep.subr.mxu0 0.0
    %1405 = vmatpush1.msra.mxu0 0.0
    %1406 = vmatprep.subr.mxu0 0.0
    %1407 = vmatpush1.msra.mxu0 0.0
    %1408 = vmatprep.subr.mxu0 0.0
    %1409 = vmatpush1.msra.mxu0 0.0
    %1410 = vmatprep.subr.mxu0 0.0
    %1411 = vmatpush1.msra.mxu0 0.0
    %1412 = vmatprep.subr.mxu0 0.0
    %1413 = vmatpush1.msra.mxu0 0.0
    %1414 = vmatprep.subr.mxu0 0.0
    %1415 = vmatpush1.msra.mxu0 0.0
    %1416 = vmatprep.subr.mxu0 0.0
    %1417 = vmatpush1.msra.mxu0 0.0
    %1418 = vmatprep.subr.mxu0 0.0
    %1419 = vmatpush1.msra.mxu0 0.0
    %1420 = vmatprep.subr.mxu0 0.0
    %1421 = vmatpush1.msra.mxu0 0.0
    %1422 = vmatprep.subr.mxu0 0.0
    %1423 = vmatpush1.msra.mxu0 0.0
    %1424 = vmatprep.mubr.f32.mxu0 0.0
    %1425 = vmatmul.mubr.f32.gmra.mrb[0].mxu0 %v1345
    %v1426 = vpop.f32.mrb[0].mxu0
    %v1427 = vadd.f32 0.0, %v1426
    %v1428 = vpop.f32.mrb[0].mxu0
    %v1429 = vadd.f32 0.0, %v1428
    %1430 = vdwg.mxu0
    %1431 = vmatprep.subr.mxu0 %v1339
    %1432 = vmatpush1.msra.mxu0 %v1338
    %1433 = vmatprep.subr.mxu0 %v1358
    %1434 = vmatpush1.msra.mxu0 %v1355
    %1435 = vmatprep.subr.mxu0 0.0
    %1436 = vmatpush1.msra.mxu0 0.0
    %1437 = vmatprep.subr.mxu0 0.0
    %1438 = vmatpush1.msra.mxu0 0.0
    %1439 = vmatprep.subr.mxu0 0.0
    %1440 = vmatpush1.msra.mxu0 0.0
    %1441 = vmatprep.subr.mxu0 0.0
    %1442 = vmatpush1.msra.mxu0 0.0
    %1443 = vmatprep.subr.mxu0 0.0
    %1444 = vmatpush1.msra.mxu0 0.0
    %1445 = vmatprep.subr.mxu0 0.0
    %1446 = vmatpush1.msra.mxu0 0.0
    %1447 = vmatprep.subr.mxu0 0.0
    %1448 = vmatpush1.msra.mxu0 0.0
    %1449 = vmatprep.subr.mxu0 0.0
    %1450 = vmatpush1.msra.mxu0 0.0
    %1451 = vmatprep.subr.mxu0 0.0
    %1452 = vmatpush1.msra.mxu0 0.0
    %1453 = vmatprep.subr.mxu0 0.0
    %1454 = vmatpush1.msra.mxu0 0.0
    %1455 = vmatprep.subr.mxu0 0.0
    %1456 = vmatpush1.msra.mxu0 0.0
    %1457 = vmatprep.subr.mxu0 0.0
    %1458 = vmatpush1.msra.mxu0 0.0
    %1459 = vmatprep.subr.mxu0 0.0
    %1460 = vmatpush1.msra.mxu0 0.0
    %1461 = vmatprep.subr.mxu0 0.0
    %1462 = vmatpush1.msra.mxu0 0.0
    %1463 = vmatprep.subr.mxu0 0.0
    %1464 = vmatpush1.msra.mxu0 0.0
    %1465 = vmatprep.subr.mxu0 0.0
    %1466 = vmatpush1.msra.mxu0 0.0
    %1467 = vmatprep.subr.mxu0 0.0
    %1468 = vmatpush1.msra.mxu0 0.0
    %1469 = vmatprep.subr.mxu0 0.0
    %1470 = vmatpush1.msra.mxu0 0.0
    %1471 = vmatprep.subr.mxu0 0.0
    %1472 = vmatpush1.msra.mxu0 0.0
    %1473 = vmatprep.subr.mxu0 0.0
    %1474 = vmatpush1.msra.mxu0 0.0
    %1475 = vmatprep.subr.mxu0 0.0
    %1476 = vmatpush1.msra.mxu0 0.0
    %1477 = vmatprep.subr.mxu0 0.0
    %1478 = vmatpush1.msra.mxu0 0.0
    %1479 = vmatprep.subr.mxu0 0.0
    %1480 = vmatpush1.msra.mxu0 0.0
    %1481 = vmatprep.subr.mxu0 0.0
    %1482 = vmatpush1.msra.mxu0 0.0
    %1483 = vmatprep.subr.mxu0 0.0
    %1484 = vmatpush1.msra.mxu0 0.0
    %1485 = vmatprep.subr.mxu0 0.0
    %1486 = vmatpush1.msra.mxu0 0.0
    %1487 = vmatprep.subr.mxu0 0.0
    %1488 = vmatpush1.msra.mxu0 0.0
    %1489 = vmatprep.subr.mxu0 0.0
    %1490 = vmatpush1.msra.mxu0 0.0
    %1491 = vmatprep.subr.mxu0 0.0
    %1492 = vmatpush1.msra.mxu0 0.0
    %1493 = vmatprep.subr.mxu0 0.0
    %1494 = vmatpush1.msra.mxu0 0.0
    %1495 = vmatprep.mubr.f32.mxu0 0.0
    %1496 = vmatmul.mubr.f32.gmra.mrb[0].mxu0 %v1345
    %v1497 = vpop.f32.mrb[0].mxu0
    %v1498 = vadd.f32 0.0, %v1497
    %v1499 = vpop.f32.mrb[0].mxu0
    %v1500 = vadd.f32 0.0, %v1499
    %1501 = vdwg.mxu0
    %v1602 = vunpack.c.l.b16 %v1236
    %v1603 = vunpack.c.h.b16 %v1236
    %v1604 = vunpack.c.l.b16 %v1237
    %v1605 = vunpack.c.h.b16 %v1237
    %v1606 = vunpack.c.l.b16 %v1238
    %v1607 = vunpack.c.h.b16 %v1238
    %v1608 = vunpack.c.l.b16 %v1239
    %v1609 = vunpack.c.h.b16 %v1239
    %v1610 = vunpack.c.l.b16 %v1240
    %v1611 = vunpack.c.h.b16 %v1240
    %v1612 = vunpack.c.l.b16 %v1241
    %v1613 = vunpack.c.h.b16 %v1241
    %v1614 = vunpack.c.l.b16 %v1242
    %v1615 = vunpack.c.h.b16 %v1242
    %v1616 = vunpack.c.l.b16 %v1243
    %v1617 = vunpack.c.h.b16 %v1243
    %v1618 = vunpack.c.l.b16 %v1244
    %v1619 = vunpack.c.h.b16 %v1244
    %v1620 = vunpack.c.l.b16 %v1245
    %v1621 = vunpack.c.h.b16 %v1245
    %v1622 = vunpack.c.l.b16 %v1246
    %v1623 = vunpack.c.h.b16 %v1246
    %v1624 = vunpack.c.l.b16 %v1247
    %v1625 = vunpack.c.h.b16 %v1247
    %v1626 = vunpack.c.l.b16 %v1248
    %v1627 = vunpack.c.h.b16 %v1248
    %v1628 = vunpack.c.l.b16 %v1249
    %v1629 = vunpack.c.h.b16 %v1249
    %v1630 = vunpack.c.l.b16 %v1250
    %v1631 = vunpack.c.h.b16 %v1250
    %v1632 = vunpack.c.l.b16 %v1251
    %v1633 = vunpack.c.h.b16 %v1251
    %v1634 = vunpack.c.l.b16 %v1252
    %v1635 = vunpack.c.h.b16 %v1252
    %v1636 = vunpack.c.l.b16 %v1253
    %v1637 = vunpack.c.h.b16 %v1253
    %v1638 = vunpack.c.l.b16 %v1254
    %v1639 = vunpack.c.h.b16 %v1254
    %v1640 = vunpack.c.l.b16 %v1255
    %v1641 = vunpack.c.h.b16 %v1255
    %v1642 = vunpack.c.l.b16 %v1256
    %v1643 = vunpack.c.h.b16 %v1256
    %v1644 = vunpack.c.l.b16 %v1257
    %v1645 = vunpack.c.h.b16 %v1257
    %v1646 = vunpack.c.l.b16 %v1258
    %v1647 = vunpack.c.h.b16 %v1258
    %v1648 = vunpack.c.l.b16 %v1259
    %v1649 = vunpack.c.h.b16 %v1259
    %v1650 = vunpack.c.l.b16 %v1260
    %v1651 = vunpack.c.h.b16 %v1260
    %v1652 = vunpack.c.l.b16 %v1261
    %v1653 = vunpack.c.h.b16 %v1261
    %v1654 = vunpack.c.l.b16 %v1262
    %v1655 = vunpack.c.h.b16 %v1262
    %v1656 = vunpack.c.l.b16 %v1263
    %v1657 = vunpack.c.h.b16 %v1263
    %v1658 = vunpack.c.l.b16 %v1264
    %v1659 = vunpack.c.h.b16 %v1264
    %v1660 = vunpack.c.l.b16 %v1265
    %v1661 = vunpack.c.h.b16 %v1265
    %v1662 = vunpack.c.l.b16 %v1266
    %v1663 = vunpack.c.h.b16 %v1266
    %v1664 = vunpack.c.l.b16 %v1267
    %v1665 = vunpack.c.h.b16 %v1267
    %v1666 = vunpack.c.l.b16 %v1268
    %v1667 = vunpack.c.h.b16 %v1268
    %v1668 = vunpack.c.l.b16 %v1269
    %v1669 = vunpack.c.h.b16 %v1269
    %v1670 = vunpack.c.l.b16 %v1270
    %v1671 = vunpack.c.h.b16 %v1270
    %v1672 = vunpack.c.l.b16 %v1271
    %v1673 = vunpack.c.h.b16 %v1271
    %v1674 = vunpack.c.l.b16 %v1272
    %v1675 = vunpack.c.h.b16 %v1272
    %v1676 = vunpack.c.l.b16 %v1273
    %v1677 = vunpack.c.h.b16 %v1273
    %v1678 = vunpack.c.l.b16 %v1274
    %v1679 = vunpack.c.h.b16 %v1274
    %v1680 = vunpack.c.l.b16 %v1275
    %v1681 = vunpack.c.h.b16 %v1275
    %v1682 = vunpack.c.l.b16 %v1276
    %v1683 = vunpack.c.h.b16 %v1276
    %v1684 = vunpack.c.l.b16 %v1277
    %v1685 = vunpack.c.h.b16 %v1277
    %v1686 = vunpack.c.l.b16 %v1278
    %v1687 = vunpack.c.h.b16 %v1278
    %v1688 = vunpack.c.l.b16 %v1279
    %v1689 = vunpack.c.h.b16 %v1279
    %v1690 = vunpack.c.l.b16 %v1280
    %v1691 = vunpack.c.h.b16 %v1280
    %v1692 = vunpack.c.l.b16 %v1281
    %v1693 = vunpack.c.h.b16 %v1281
    %v1694 = vunpack.c.l.b16 %v1282
    %v1695 = vunpack.c.h.b16 %v1282
    %v1696 = vunpack.c.l.b16 %v1283
    %v1697 = vunpack.c.h.b16 %v1283
    %v1698 = vunpack.c.l.b16 %v1284
    %v1699 = vunpack.c.h.b16 %v1284
    %v1700 = vunpack.c.l.b16 %v1285
    %v1701 = vunpack.c.h.b16 %v1285
    %v1702 = vunpack.c.l.b16 %v1286
    %v1703 = vunpack.c.h.b16 %v1286
    %v1704 = vunpack.c.l.b16 %v1287
    %v1705 = vunpack.c.h.b16 %v1287
    %v1706 = vunpack.c.l.b16 %v1288
    %v1707 = vunpack.c.h.b16 %v1288
    %v1708 = vunpack.c.l.b16 %v1289
    %v1709 = vunpack.c.h.b16 %v1289
    %v1710 = vunpack.c.l.b16 %v1290
    %v1711 = vunpack.c.h.b16 %v1290
    %v1712 = vunpack.c.l.b16 %v1291
    %v1713 = vunpack.c.h.b16 %v1291
    %v1714 = vunpack.c.l.b16 %v1292
    %v1715 = vunpack.c.h.b16 %v1292
    %v1716 = vunpack.c.l.b16 %v1293
    %v1717 = vunpack.c.h.b16 %v1293
    %v1718 = vunpack.c.l.b16 %v1294
    %v1719 = vunpack.c.h.b16 %v1294
    %v1720 = vunpack.c.l.b16 %v1295
    %v1721 = vunpack.c.h.b16 %v1295
    %v1722 = vunpack.c.l.b16 %v1296
    %v1723 = vunpack.c.h.b16 %v1296
    %v1724 = vunpack.c.l.b16 %v1297
    %v1725 = vunpack.c.h.b16 %v1297
    %v1726 = vunpack.c.l.b16 %v1298
    %v1727 = vunpack.c.h.b16 %v1298
    %v1728 = vunpack.c.l.b16 %v1299
    %v1729 = vunpack.c.h.b16 %v1299
    %v1730 = vunpack.c.l.b16 %v1300
    %v1731 = vunpack.c.h.b16 %v1300
    %v1732 = vunpack.c.l.b16 %v1301
    %v1733 = vunpack.c.h.b16 %v1301
    %v1734 = vunpack.c.l.b16 %v1302
    %v1735 = vunpack.c.h.b16 %v1302
    %v1736 = vunpack.c.l.b16 %v1303
    %v1737 = vunpack.c.h.b16 %v1303
    %v1738 = vunpack.c.l.b16 %v1304
    %v1739 = vunpack.c.h.b16 %v1304
    %v1740 = vunpack.c.l.b16 %v1305
    %v1741 = vunpack.c.h.b16 %v1305
    %v1742 = vunpack.c.l.b16 %v1306
    %v1743 = vunpack.c.h.b16 %v1306
    %v1744 = vunpack.c.l.b16 %v1307
    %v1745 = vunpack.c.h.b16 %v1307
    %v1746 = vunpack.c.l.b16 %v1308
    %v1747 = vunpack.c.h.b16 %v1308
    %v1748 = vunpack.c.l.b16 %v1309
    %v1749 = vunpack.c.h.b16 %v1309
    %v1750 = vunpack.c.l.b16 %v1310
    %v1751 = vunpack.c.h.b16 %v1310
    %v1752 = vunpack.c.l.b16 %v1311
    %v1753 = vunpack.c.h.b16 %v1311
    %v1754 = vunpack.c.l.b16 %v1312
    %v1755 = vunpack.c.h.b16 %v1312
    %v1756 = vunpack.c.l.b16 %v1313
    %v1757 = vunpack.c.h.b16 %v1313
    %v1758 = vunpack.c.l.b16 %v1314
    %v1759 = vunpack.c.h.b16 %v1314
    %v1760 = vunpack.c.l.b16 %v1315
    %v1761 = vunpack.c.h.b16 %v1315
    %v1762 = vunpack.c.l.b16 %v1316
    %v1763 = vunpack.c.h.b16 %v1316
    %v1764 = vunpack.c.l.b16 %v1317
    %v1765 = vunpack.c.h.b16 %v1317
    %v1766 = vunpack.c.l.b16 %v1318
    %v1767 = vunpack.c.h.b16 %v1318
    %v1768 = vunpack.c.l.b16 %v1319
    %v1769 = vunpack.c.h.b16 %v1319
    %v1770 = vunpack.c.l.b16 %v1320
    %v1771 = vunpack.c.h.b16 %v1320
    %v1772 = vunpack.c.l.b16 %v1321
    %v1773 = vunpack.c.h.b16 %v1321
    %v1774 = vunpack.c.l.b16 %v1322
    %v1775 = vunpack.c.h.b16 %v1322
    %v1776 = vunpack.c.l.b16 %v1323
    %v1777 = vunpack.c.h.b16 %v1323
    %v1778 = vunpack.c.l.b16 %v1324
    %v1779 = vunpack.c.h.b16 %v1324
    %v1780 = vunpack.c.l.b16 %v1325
    %v1781 = vunpack.c.h.b16 %v1325
    %v1782 = vunpack.c.l.b16 %v1326
    %v1783 = vunpack.c.h.b16 %v1326
    %v1784 = vunpack.c.l.b16 %v1327
    %v1785 = vunpack.c.h.b16 %v1327
    %v1786 = vunpack.c.l.b16 %v1328
    %v1787 = vunpack.c.h.b16 %v1328
    %v1788 = vunpack.c.l.b16 %v1329
    %v1789 = vunpack.c.h.b16 %v1329
    %v1790 = vunpack.c.l.b16 %v1330
    %v1791 = vunpack.c.h.b16 %v1330
    %v1792 = vunpack.c.l.b16 %v1331
    %v1793 = vunpack.c.h.b16 %v1331
    %v1794 = vunpack.c.l.b16 %v1332
    %v1795 = vunpack.c.h.b16 %v1332
    %v1796 = vunpack.c.l.b16 %v1333
    %v1797 = vunpack.c.h.b16 %v1333
    %v1798 = vunpack.c.l.b16 %v1334
    %v1799 = vunpack.c.h.b16 %v1334
    %v1800 = vunpack.c.l.b16 %v1335
    %v1801 = vunpack.c.h.b16 %v1335
    %v1802 = vpack.c.b16 %v1606, %v1602
    %v1803 = vpack.c.b16 %v1607, %v1603
    %v1804 = vpack.c.b16 %v1608, %v1604
    %v1805 = vpack.c.b16 %v1609, %v1605
    %v1806 = vpack.c.b16 %v1614, %v1610
    %v1807 = vpack.c.b16 %v1615, %v1611
    %v1808 = vpack.c.b16 %v1616, %v1612
    %v1809 = vpack.c.b16 %v1617, %v1613
    %v1810 = vpack.c.b16 %v1622, %v1618
    %v1811 = vpack.c.b16 %v1623, %v1619
    %v1812 = vpack.c.b16 %v1624, %v1620
    %v1813 = vpack.c.b16 %v1625, %v1621
    %v1814 = vpack.c.b16 %v1630, %v1626
    %v1815 = vpack.c.b16 %v1631, %v1627
    %v1816 = vpack.c.b16 %v1632, %v1628
    %v1817 = vpack.c.b16 %v1633, %v1629
    %v1818 = vpack.c.b16 %v1638, %v1634
    %v1819 = vpack.c.b16 %v1639, %v1635
    %v1820 = vpack.c.b16 %v1640, %v1636
    %v1821 = vpack.c.b16 %v1641, %v1637
    %v1822 = vpack.c.b16 %v1646, %v1642
    %v1823 = vpack.c.b16 %v1647, %v1643
    %v1824 = vpack.c.b16 %v1648, %v1644
    %v1825 = vpack.c.b16 %v1649, %v1645
    %v1826 = vpack.c.b16 %v1654, %v1650
    %v1827 = vpack.c.b16 %v1655, %v1651
    %v1828 = vpack.c.b16 %v1656, %v1652
    %v1829 = vpack.c.b16 %v1657, %v1653
    %v1830 = vpack.c.b16 %v1662, %v1658
    %v1831 = vpack.c.b16 %v1663, %v1659
    %v1832 = vpack.c.b16 %v1664, %v1660
    %v1833 = vpack.c.b16 %v1665, %v1661
    %v1834 = vpack.c.b16 %v1670, %v1666
    %v1835 = vpack.c.b16 %v1671, %v1667
    %v1836 = vpack.c.b16 %v1672, %v1668
    %v1837 = vpack.c.b16 %v1673, %v1669
    %v1838 = vpack.c.b16 %v1678, %v1674
    %v1839 = vpack.c.b16 %v1679, %v1675
    %v1840 = vpack.c.b16 %v1680, %v1676
    %v1841 = vpack.c.b16 %v1681, %v1677
    %v1842 = vpack.c.b16 %v1686, %v1682
    %v1843 = vpack.c.b16 %v1687, %v1683
    %v1844 = vpack.c.b16 %v1688, %v1684
    %v1845 = vpack.c.b16 %v1689, %v1685
    %v1846 = vpack.c.b16 %v1694, %v1690
    %v1847 = vpack.c.b16 %v1695, %v1691
    %v1848 = vpack.c.b16 %v1696, %v1692
    %v1849 = vpack.c.b16 %v1697, %v1693
    %v1850 = vpack.c.b16 %v1702, %v1698
    %v1851 = vpack.c.b16 %v1703, %v1699
    %v1852 = vpack.c.b16 %v1704, %v1700
    %v1853 = vpack.c.b16 %v1705, %v1701
    %v1854 = vpack.c.b16 %v1710, %v1706
    %v1855 = vpack.c.b16 %v1711, %v1707
    %v1856 = vpack.c.b16 %v1712, %v1708
    %v1857 = vpack.c.b16 %v1713, %v1709
    %v1858 = vpack.c.b16 %v1718, %v1714
    %v1859 = vpack.c.b16 %v1719, %v1715
    %v1860 = vpack.c.b16 %v1720, %v1716
    %v1861 = vpack.c.b16 %v1721, %v1717
    %v1862 = vpack.c.b16 %v1726, %v1722
    %v1863 = vpack.c.b16 %v1727, %v1723
    %v1864 = vpack.c.b16 %v1728, %v1724
    %v1865 = vpack.c.b16 %v1729, %v1725
    %v1866 = vpack.c.b16 %v1734, %v1730
    %v1867 = vpack.c.b16 %v1735, %v1731
    %v1868 = vpack.c.b16 %v1736, %v1732
    %v1869 = vpack.c.b16 %v1737, %v1733
    %v1870 = vpack.c.b16 %v1742, %v1738
    %v1871 = vpack.c.b16 %v1743, %v1739
    %v1872 = vpack.c.b16 %v1744, %v1740
    %v1873 = vpack.c.b16 %v1745, %v1741
    %v1874 = vpack.c.b16 %v1750, %v1746
    %v1875 = vpack.c.b16 %v1751, %v1747
    %v1876 = vpack.c.b16 %v1752, %v1748
    %v1877 = vpack.c.b16 %v1753, %v1749
    %v1878 = vpack.c.b16 %v1758, %v1754
    %v1879 = vpack.c.b16 %v1759, %v1755
    %v1880 = vpack.c.b16 %v1760, %v1756
    %v1881 = vpack.c.b16 %v1761, %v1757
    %v1882 = vpack.c.b16 %v1766, %v1762
    %v1883 = vpack.c.b16 %v1767, %v1763
    %v1884 = vpack.c.b16 %v1768, %v1764
    %v1885 = vpack.c.b16 %v1769, %v1765
    %v1886 = vpack.c.b16 %v1774, %v1770
    %v1887 = vpack.c.b16 %v1775, %v1771
    %v1888 = vpack.c.b16 %v1776, %v1772
    %v1889 = vpack.c.b16 %v1777, %v1773
    %v1890 = vpack.c.b16 %v1782, %v1778
    %v1891 = vpack.c.b16 %v1783, %v1779
    %v1892 = vpack.c.b16 %v1784, %v1780
    %v1893 = vpack.c.b16 %v1785, %v1781
    %v1894 = vpack.c.b16 %v1790, %v1786
    %v1895 = vpack.c.b16 %v1791, %v1787
    %v1896 = vpack.c.b16 %v1792, %v1788
    %v1897 = vpack.c.b16 %v1793, %v1789
    %v1898 = vpack.c.b16 %v1798, %v1794
    %v1899 = vpack.c.b16 %v1799, %v1795
    %v1900 = vpack.c.b16 %v1800, %v1796
    %v1901 = vpack.c.b16 %v1801, %v1797
    %v2003 = vsel %vm1017, %v1235, 0
    %2005 = vmatprep.subr.bf16.mxu0 %v1803
    %2006 = vmatpush1.bf16.msra.mxu0 %v1802
    %2007 = vmatprep.subr.bf16.mxu0 %v1807
    %2008 = vmatpush1.bf16.msra.mxu0 %v1806
    %2009 = vmatprep.subr.bf16.mxu0 %v1811
    %2010 = vmatpush1.bf16.msra.mxu0 %v1810
    %2011 = vmatprep.subr.bf16.mxu0 %v1815
    %2012 = vmatpush1.bf16.msra.mxu0 %v1814
    %2013 = vmatprep.subr.bf16.mxu0 %v1819
    %2014 = vmatpush1.bf16.msra.mxu0 %v1818
    %2015 = vmatprep.subr.bf16.mxu0 %v1823
    %2016 = vmatpush1.bf16.msra.mxu0 %v1822
    %2017 = vmatprep.subr.bf16.mxu0 %v1827
    %2018 = vmatpush1.bf16.msra.mxu0 %v1826
    %2019 = vmatprep.subr.bf16.mxu0 %v1831
    %2020 = vmatpush1.bf16.msra.mxu0 %v1830
    %2021 = vmatprep.subr.bf16.mxu0 %v1835
    %2022 = vmatpush1.bf16.msra.mxu0 %v1834
    %2023 = vmatprep.subr.bf16.mxu0 %v1839
    %2024 = vmatpush1.bf16.msra.mxu0 %v1838
    %2025 = vmatprep.subr.bf16.mxu0 %v1843
    %2026 = vmatpush1.bf16.msra.mxu0 %v1842
    %2027 = vmatprep.subr.bf16.mxu0 %v1847
    %2028 = vmatpush1.bf16.msra.mxu0 %v1846
    %2029 = vmatprep.subr.bf16.mxu0 %v1851
    %2030 = vmatpush1.bf16.msra.mxu0 %v1850
    %2031 = vmatprep.subr.bf16.mxu0 %v1855
    %2032 = vmatpush1.bf16.msra.mxu0 %v1854
    %2033 = vmatprep.subr.bf16.mxu0 %v1859
    %2034 = vmatpush1.bf16.msra.mxu0 %v1858
    %2035 = vmatprep.subr.bf16.mxu0 %v1863
    %2036 = vmatpush1.bf16.msra.mxu0 %v1862
    %2037 = vmatprep.mubr.bf16.mxu0 %v1233
    %2038 = vmatmul.mubr.bf16.gmra.mrb[0].mxu0 %v1232
    %v2039 = vpop.f32.mrb[0].mxu0
    %v2040 = vadd.f32 %v1427, %v2039
    %v2041 = vpop.f32.mrb[0].mxu0
    %v2042 = vadd.f32 %v1429, %v2041
    %v2043 = vpop.f32.mrb[0].mxu0
    %v2044 = vpop.f32.mrb[0].mxu0
    %2045 = vdwg.mxu0
    %2046 = vmatprep.subr.bf16.mxu0 %v1867
    %2047 = vmatpush1.bf16.msra.mxu0 %v1866
    %2048 = vmatprep.subr.bf16.mxu0 %v1871
    %2049 = vmatpush1.bf16.msra.mxu0 %v1870
    %2050 = vmatprep.subr.bf16.mxu0 %v1875
    %2051 = vmatpush1.bf16.msra.mxu0 %v1874
    %2052 = vmatprep.subr.bf16.mxu0 %v1879
    %2053 = vmatpush1.bf16.msra.mxu0 %v1878
    %2054 = vmatprep.subr.bf16.mxu0 %v1883
    %2055 = vmatpush1.bf16.msra.mxu0 %v1882
    %2056 = vmatprep.subr.bf16.mxu0 %v1887
    %2057 = vmatpush1.bf16.msra.mxu0 %v1886
    %2058 = vmatprep.subr.bf16.mxu0 %v1891
    %2059 = vmatpush1.bf16.msra.mxu0 %v1890
    %2060 = vmatprep.subr.bf16.mxu0 %v1895
    %2061 = vmatpush1.bf16.msra.mxu0 %v1894
    %2062 = vmatprep.subr.bf16.mxu0 %v1899
    %2063 = vmatpush1.bf16.msra.mxu0 %v1898
    %2064 = vmatprep.subr.bf16.mxu0 0
    %2065 = vmatpush1.bf16.msra.mxu0 0
    %2066 = vmatprep.subr.bf16.mxu0 0
    %2067 = vmatpush1.bf16.msra.mxu0 0
    %2068 = vmatprep.subr.bf16.mxu0 0
    %2069 = vmatpush1.bf16.msra.mxu0 0
    %2070 = vmatprep.subr.bf16.mxu0 0
    %2071 = vmatpush1.bf16.msra.mxu0 0
    %2072 = vmatprep.subr.bf16.mxu0 0
    %2073 = vmatpush1.bf16.msra.mxu0 0
    %2074 = vmatprep.subr.bf16.mxu0 0
    %2075 = vmatpush1.bf16.msra.mxu0 0
    %2076 = vmatprep.subr.bf16.mxu0 0
    %2077 = vmatpush1.bf16.msra.mxu0 0
    %2078 = vmatprep.mubr.bf16.mxu0 %v2003
    %2079 = vmatmul.mubr.bf16.gmra.mrb[0].mxu0 %v1234
    %v2080 = vpop.f32.mrb[0].mxu0
    %v2081 = vadd.f32 %v2040, %v2080
    %v2082 = vpop.f32.mrb[0].mxu0
    %v2083 = vadd.f32 %v2042, %v2082
    %v2084 = vpop.f32.mrb[0].mxu0
    %v2085 = vpop.f32.mrb[0].mxu0
    %2086 = vdwg.mxu0
    %2087 = vmatprep.subr.bf16.mxu0 %v1805
    %2088 = vmatpush1.bf16.msra.mxu0 %v1804
    %2089 = vmatprep.subr.bf16.mxu0 %v1809
    %2090 = vmatpush1.bf16.msra.mxu0 %v1808
    %2091 = vmatprep.subr.bf16.mxu0 %v1813
    %2092 = vmatpush1.bf16.msra.mxu0 %v1812
    %2093 = vmatprep.subr.bf16.mxu0 %v1817
    %2094 = vmatpush1.bf16.msra.mxu0 %v1816
    %2095 = vmatprep.subr.bf16.mxu0 %v1821
    %2096 = vmatpush1.bf16.msra.mxu0 %v1820
    %2097 = vmatprep.subr.bf16.mxu0 %v1825
    %2098 = vmatpush1.bf16.msra.mxu0 %v1824
    %2099 = vmatprep.subr.bf16.mxu0 %v1829
    %2100 = vmatpush1.bf16.msra.mxu0 %v1828
    %2101 = vmatprep.subr.bf16.mxu0 %v1833
    %2102 = vmatpush1.bf16.msra.mxu0 %v1832
    %2103 = vmatprep.subr.bf16.mxu0 %v1837
    %2104 = vmatpush1.bf16.msra.mxu0 %v1836
    %2105 = vmatprep.subr.bf16.mxu0 %v1841
    %2106 = vmatpush1.bf16.msra.mxu0 %v1840
    %2107 = vmatprep.subr.bf16.mxu0 %v1845
    %2108 = vmatpush1.bf16.msra.mxu0 %v1844
    %2109 = vmatprep.subr.bf16.mxu0 %v1849
    %2110 = vmatpush1.bf16.msra.mxu0 %v1848
    %2111 = vmatprep.subr.bf16.mxu0 %v1853
    %2112 = vmatpush1.bf16.msra.mxu0 %v1852
    %2113 = vmatprep.subr.bf16.mxu0 %v1857
    %2114 = vmatpush1.bf16.msra.mxu0 %v1856
    %2115 = vmatprep.subr.bf16.mxu0 %v1861
    %2116 = vmatpush1.bf16.msra.mxu0 %v1860
    %2117 = vmatprep.subr.bf16.mxu0 %v1865
    %2118 = vmatpush1.bf16.msra.mxu0 %v1864
    %2119 = vmatprep.mubr.bf16.mxu0 %v1233
    %2120 = vmatmul.mubr.bf16.gmra.mrb[0].mxu0 %v1232
    %v2121 = vpop.f32.mrb[0].mxu0
    %v2122 = vadd.f32 %v1498, %v2121
    %v2123 = vpop.f32.mrb[0].mxu0
    %v2124 = vadd.f32 %v1500, %v2123
    %v2125 = vpop.f32.mrb[0].mxu0
    %v2126 = vpop.f32.mrb[0].mxu0
    %2127 = vdwg.mxu0
    %2128 = vmatprep.subr.bf16.mxu0 %v1869
    %2129 = vmatpush1.bf16.msra.mxu0 %v1868
    %2130 = vmatprep.subr.bf16.mxu0 %v1873
    %2131 = vmatpush1.bf16.msra.mxu0 %v1872
    %2132 = vmatprep.subr.bf16.mxu0 %v1877
    %2133 = vmatpush1.bf16.msra.mxu0 %v1876
    %2134 = vmatprep.subr.bf16.mxu0 %v1881
    %2135 = vmatpush1.bf16.msra.mxu0 %v1880
    %2136 = vmatprep.subr.bf16.mxu0 %v1885
    %2137 = vmatpush1.bf16.msra.mxu0 %v1884
    %2138 = vmatprep.subr.bf16.mxu0 %v1889
    %2139 = vmatpush1.bf16.msra.mxu0 %v1888
    %2140 = vmatprep.subr.bf16.mxu0 %v1893
    %2141 = vmatpush1.bf16.msra.mxu0 %v1892
    %2142 = vmatprep.subr.bf16.mxu0 %v1897
    %2143 = vmatpush1.bf16.msra.mxu0 %v1896
    %2144 = vmatprep.subr.bf16.mxu0 %v1901
    %2145 = vmatpush1.bf16.msra.mxu0 %v1900
    %2146 = vmatprep.subr.bf16.mxu0 0
    %2147 = vmatpush1.bf16.msra.mxu0 0
    %2148 = vmatprep.subr.bf16.mxu0 0
    %2149 = vmatpush1.bf16.msra.mxu0 0
    %2150 = vmatprep.subr.bf16.mxu0 0
    %2151 = vmatpush1.bf16.msra.mxu0 0
    %2152 = vmatprep.subr.bf16.mxu0 0
    %2153 = vmatpush1.bf16.msra.mxu0 0
    %2154 = vmatprep.subr.bf16.mxu0 0
    %2155 = vmatpush1.bf16.msra.mxu0 0
    %2156 = vmatprep.subr.bf16.mxu0 0
    %2157 = vmatpush1.bf16.msra.mxu0 0
    %2158 = vmatprep.subr.bf16.mxu0 0
    %2159 = vmatpush1.bf16.msra.mxu0 0
    %2160 = vmatprep.mubr.bf16.mxu0 %v2003
    %2161 = vmatmul.mubr.bf16.gmra.mrb[0].mxu0 %v1234
    %v2162 = vpop.f32.mrb[0].mxu0
    %v2163 = vadd.f32 %v2122, %v2162
    %v2164 = vpop.f32.mrb[0].mxu0
    %v2165 = vadd.f32 %v2124, %v2164
    %v2166 = vpop.f32.mrb[0].mxu0
    %v2167 = vpop.f32.mrb[0].mxu0
    %2168 = vdwg.mxu0
    %v2170 = vlaneseq
    %v2171 = vshrl.u32 %v2170, 7
    %v2172 = vsub.s32 0, %v2171
    %v2173 = vrot.slane %v79, %v2172
    %v2174 = vlaneseq
    %v2175 = vshrl.u32 %v2174, 7
    %v2176 = vsub.s32 1, %v2175
    %v2177 = vrot.slane %v79, %v2176
    %v2178 = vlaneseq
    %v2179 = vshrl.u32 %v2178, 7
    %v2180 = vsub.s32 2, %v2179
    %v2181 = vrot.slane %v79, %v2180
    %v2182 = vlaneseq
    %v2183 = vshrl.u32 %v2182, 7
    %v2184 = vsub.s32 3, %v2183
    %v2185 = vrot.slane %v79, %v2184
    %v2190 = vadd.f32 %v2081, %v2173
    %v2191 = vadd.f32 %v2083, %v2177
    %v2192 = vadd.f32 %v2163, %v2181
    %v2193 = vadd.f32 %v2165, %v2185
    %v2194 = vadd.f32 %v2190, %v2191
    %v2195 = vadd.f32 %v2194, %v2192
    %v2196 = vadd.f32 %v2195, %v2193
    %2197 = vadd.xlane.f32.xlu0 %v2196
    %v2198 = vpop.xlane.xlu0 %2197
    %v2199 = vmul.f32 %v2190, %v2190
    %v2200 = vmul.f32 %v2191, %v2191
    %v2201 = vmul.f32 %v2192, %v2192
    %v2202 = vmul.f32 %v2193, %v2193
    %v2203 = vadd.f32 %v2199, %v2200
    %v2204 = vadd.f32 %v2203, %v2201
    %v2205 = vadd.f32 %v2204, %v2202
    %2206 = vadd.xlane.f32.xlu0 %v2205
    %v2207 = vpop.xlane.xlu0 %2206
    %v2208 = vmul.f32 %v2198, 0.001953125
    %v2209 = vmul.f32 %v2207, 0.001953125
    %v2210 = vmul.f32 %v2208, %v2208
    %v2211 = vsub.f32 %v2209, %v2210
    %v2212 = vsub.f32 %v2190, %v2208
    %v2213 = vsub.f32 %v2191, %v2208
    %v2214 = vsub.f32 %v2192, %v2208
    %v2215 = vsub.f32 %v2193, %v2208
    %v2216 = vadd.f32 %v2211, 1e-05
    %v2217 = vrsqrt.pop %v2216
    %v2218 = vmul.f32 %v2212, %v2217
    %v2219 = vmul.f32 %v2213, %v2217
    %v2220 = vmul.f32 %v2214, %v2217
    %v2221 = vmul.f32 %v2215, %v2217
    %v2223 = vlaneseq
    %v2224 = vshrl.u32 %v2223, 7
    %v2225 = vsub.s32 0, %v2224
    %v2226 = vrot.slane %v81, %v2225
    %v2227 = vlaneseq
    %v2228 = vshrl.u32 %v2227, 7
    %v2229 = vsub.s32 1, %v2228
    %v2230 = vrot.slane %v81, %v2229
    %v2231 = vlaneseq
    %v2232 = vshrl.u32 %v2231, 7
    %v2233 = vsub.s32 2, %v2232
    %v2234 = vrot.slane %v81, %v2233
    %v2235 = vlaneseq
    %v2236 = vshrl.u32 %v2235, 7
    %v2237 = vsub.s32 3, %v2236
    %v2238 = vrot.slane %v81, %v2237
    %v2243 = vmul.f32 %v2218, %v2226
    %v2244 = vmul.f32 %v2219, %v2230
    %v2245 = vmul.f32 %v2220, %v2234
    %v2246 = vmul.f32 %v2221, %v2238
    %v2248 = vlaneseq
    %v2249 = vshrl.u32 %v2248, 7
    %v2250 = vsub.s32 0, %v2249
    %v2251 = vrot.slane %v83, %v2250
    %v2252 = vlaneseq
    %v2253 = vshrl.u32 %v2252, 7
    %v2254 = vsub.s32 1, %v2253
    %v2255 = vrot.slane %v83, %v2254
    %v2256 = vlaneseq
    %v2257 = vshrl.u32 %v2256, 7
    %v2258 = vsub.s32 2, %v2257
    %v2259 = vrot.slane %v83, %v2258
    %v2260 = vlaneseq
    %v2261 = vshrl.u32 %v2260, 7
    %v2262 = vsub.s32 3, %v2261
    %v2263 = vrot.slane %v83, %v2262
    %v2268 = vadd.f32 %v2243, %v2251
    %v2269 = vadd.f32 %v2244, %v2255
    %v2270 = vadd.f32 %v2245, %v2259
    %v2271 = vadd.f32 %v2246, %v2263
    %v2272 = vtanh.pop %v2268
    %v2273 = vtanh.pop %v2269
    %v2274 = vtanh.pop %v2270
    %v2275 = vtanh.pop %v2271
    %v2276 = vpack.c.bf16 %v2272, %v2272
    %v2277 = vpack.c.bf16 %v2273, %v2273
    %v2278 = vpack.c.bf16 %v2274, %v2274
    %v2279 = vpack.c.bf16 %v2275, %v2275
    %v2280 = vld [vmem:[#allocation7] sm:$0xff]
    %v2281 = vld [vmem:[#allocation7 + $0x8] sm:$0xff]
    %v2282 = vld [vmem:[#allocation7 + $0x10] sm:$0xff]
    %v2283 = vld [vmem:[#allocation7 + $0x18] sm:$0xff]
    %v2284 = vld [vmem:[#allocation7 + $0x20] sm:$0xff]
    %v2285 = vld [vmem:[#allocation7 + $0x28] sm:$0xff]
    %v2286 = vld [vmem:[#allocation7 + $0x30] sm:$0xff]
    %v2287 = vld [vmem:[#allocation7 + $0x38] sm:$0xff]
    %v2288 = vld [vmem:[#allocation7 + $0x40] sm:$0xff]
    %v2289 = vld [vmem:[#allocation7 + $0x48] sm:$0xff]
    %v2290 = vld [vmem:[#allocation7 + $0x50] sm:$0xff]
    %v2291 = vld [vmem:[#allocation7 + $0x58] sm:$0xff]
    %v2292 = vld [vmem:[#allocation7 + $0x60] sm:$0xff]
    %v2293 = vld [vmem:[#allocation7 + $0x68] sm:$0xff]
    %v2294 = vld [vmem:[#allocation7 + $0x70] sm:$0xff]
    %v2295 = vld [vmem:[#allocation7 + $0x78] sm:$0xff]
    %v2296 = vld [vmem:[#allocation7 + $0x80] sm:$0xff]
    %v2297 = vld [vmem:[#allocation7 + $0x88] sm:$0xff]
    %v2298 = vld [vmem:[#allocation7 + $0x90] sm:$0xff]
    %v2299 = vld [vmem:[#allocation7 + $0x98] sm:$0xff]
    %v2300 = vld [vmem:[#allocation7 + $0xa0] sm:$0xff]
    %v2301 = vld [vmem:[#allocation7 + $0xa8] sm:$0xff]
    %v2302 = vld [vmem:[#allocation7 + $0xb0] sm:$0xff]
    %v2303 = vld [vmem:[#allocation7 + $0xb8] sm:$0xff]
    %v2304 = vld [vmem:[#allocation7 + $0xc0] sm:$0xff]
    %v2305 = vld [vmem:[#allocation7 + $0xc8] sm:$0xff]
    %v2306 = vld [vmem:[#allocation7 + $0xd0] sm:$0xff]
    %v2307 = vld [vmem:[#allocation7 + $0xd8] sm:$0xff]
    %v2308 = vld [vmem:[#allocation7 + $0xe0] sm:$0xff]
    %v2309 = vld [vmem:[#allocation7 + $0xe8] sm:$0xff]
    %v2310 = vld [vmem:[#allocation7 + $0xf0] sm:$0xff]
    %v2311 = vld [vmem:[#allocation7 + $0xf8] sm:$0xff]
    %v2312 = vld [vmem:[#allocation7 + $0x100] sm:$0xff]
    %v2313 = vld [vmem:[#allocation7 + $0x108] sm:$0xff]
    %v2314 = vld [vmem:[#allocation7 + $0x110] sm:$0xff]
    %v2315 = vld [vmem:[#allocation7 + $0x118] sm:$0xff]
    %v2316 = vld [vmem:[#allocation7 + $0x120] sm:$0xff]
    %v2317 = vld [vmem:[#allocation7 + $0x128] sm:$0xff]
    %v2318 = vld [vmem:[#allocation7 + $0x130] sm:$0xff]
    %v2319 = vld [vmem:[#allocation7 + $0x138] sm:$0xff]
    %v2320 = vld [vmem:[#allocation7 + $0x140] sm:$0xff]
    %v2321 = vld [vmem:[#allocation7 + $0x148] sm:$0xff]
    %v2322 = vld [vmem:[#allocation7 + $0x150] sm:$0xff]
    %v2323 = vld [vmem:[#allocation7 + $0x158] sm:$0xff]
    %v2324 = vld [vmem:[#allocation7 + $0x160] sm:$0xff]
    %v2325 = vld [vmem:[#allocation7 + $0x168] sm:$0xff]
    %v2326 = vld [vmem:[#allocation7 + $0x170] sm:$0xff]
    %v2327 = vld [vmem:[#allocation7 + $0x178] sm:$0xff]
    %v2328 = vld [vmem:[#allocation7 + $0x180] sm:$0xff]
    %v2329 = vld [vmem:[#allocation7 + $0x188] sm:$0xff]
    %v2330 = vld [vmem:[#allocation7 + $0x190] sm:$0xff]
    %v2331 = vld [vmem:[#allocation7 + $0x198] sm:$0xff]
    %v2332 = vld [vmem:[#allocation7 + $0x1a0] sm:$0xff]
    %v2333 = vld [vmem:[#allocation7 + $0x1a8] sm:$0xff]
    %v2334 = vld [vmem:[#allocation7 + $0x1b0] sm:$0xff]
    %v2335 = vld [vmem:[#allocation7 + $0x1b8] sm:$0xff]
    %v2336 = vld [vmem:[#allocation7 + $0x1c0] sm:$0xff]
    %v2337 = vld [vmem:[#allocation7 + $0x1c8] sm:$0xff]
    %v2338 = vld [vmem:[#allocation7 + $0x1d0] sm:$0xff]
    %v2339 = vld [vmem:[#allocation7 + $0x1d8] sm:$0xff]
    %v2340 = vld [vmem:[#allocation7 + $0x1e0] sm:$0xff]
    %v2341 = vld [vmem:[#allocation7 + $0x1e8] sm:$0xff]
    %v2342 = vld [vmem:[#allocation7 + $0x1f0] sm:$0xff]
    %v2343 = vld [vmem:[#allocation7 + $0x1f8] sm:$0xff]
    %v2345 = vlaneseq
    %v2346 = vshrl.u32 %v2345, 7
    %v2347 = vsub.s32 0, %v2346
    %v2348 = vrot.slane %v85, %v2347
    %v2349 = vlaneseq
    %v2350 = vshrl.u32 %v2349, 7
    %v2351 = vsub.s32 1, %v2350
    %v2352 = vrot.slane %v85, %v2351
    %v2419 = vunpack.c.l.b16 %v2280
    %v2420 = vunpack.c.h.b16 %v2280
    %v2421 = vunpack.c.l.b16 %v2281
    %v2422 = vunpack.c.h.b16 %v2281
    %v2423 = vunpack.c.l.b16 %v2282
    %v2424 = vunpack.c.h.b16 %v2282
    %v2425 = vunpack.c.l.b16 %v2283
    %v2426 = vunpack.c.h.b16 %v2283
    %v2427 = vunpack.c.l.b16 %v2284
    %v2428 = vunpack.c.h.b16 %v2284
    %v2429 = vunpack.c.l.b16 %v2285
    %v2430 = vunpack.c.h.b16 %v2285
    %v2431 = vunpack.c.l.b16 %v2286
    %v2432 = vunpack.c.h.b16 %v2286
    %v2433 = vunpack.c.l.b16 %v2287
    %v2434 = vunpack.c.h.b16 %v2287
    %v2435 = vunpack.c.l.b16 %v2288
    %v2436 = vunpack.c.h.b16 %v2288
    %v2437 = vunpack.c.l.b16 %v2289
    %v2438 = vunpack.c.h.b16 %v2289
    %v2439 = vunpack.c.l.b16 %v2290
    %v2440 = vunpack.c.h.b16 %v2290
    %v2441 = vunpack.c.l.b16 %v2291
    %v2442 = vunpack.c.h.b16 %v2291
    %v2443 = vunpack.c.l.b16 %v2292
    %v2444 = vunpack.c.h.b16 %v2292
    %v2445 = vunpack.c.l.b16 %v2293
    %v2446 = vunpack.c.h.b16 %v2293
    %v2447 = vunpack.c.l.b16 %v2294
    %v2448 = vunpack.c.h.b16 %v2294
    %v2449 = vunpack.c.l.b16 %v2295
    %v2450 = vunpack.c.h.b16 %v2295
    %v2451 = vunpack.c.l.b16 %v2296
    %v2452 = vunpack.c.h.b16 %v2296
    %v2453 = vunpack.c.l.b16 %v2297
    %v2454 = vunpack.c.h.b16 %v2297
    %v2455 = vunpack.c.l.b16 %v2298
    %v2456 = vunpack.c.h.b16 %v2298
    %v2457 = vunpack.c.l.b16 %v2299
    %v2458 = vunpack.c.h.b16 %v2299
    %v2459 = vunpack.c.l.b16 %v2300
    %v2460 = vunpack.c.h.b16 %v2300
    %v2461 = vunpack.c.l.b16 %v2301
    %v2462 = vunpack.c.h.b16 %v2301
    %v2463 = vunpack.c.l.b16 %v2302
    %v2464 = vunpack.c.h.b16 %v2302
    %v2465 = vunpack.c.l.b16 %v2303
    %v2466 = vunpack.c.h.b16 %v2303
    %v2467 = vunpack.c.l.b16 %v2304
    %v2468 = vunpack.c.h.b16 %v2304
    %v2469 = vunpack.c.l.b16 %v2305
    %v2470 = vunpack.c.h.b16 %v2305
    %v2471 = vunpack.c.l.b16 %v2306
    %v2472 = vunpack.c.h.b16 %v2306
    %v2473 = vunpack.c.l.b16 %v2307
    %v2474 = vunpack.c.h.b16 %v2307
    %v2475 = vunpack.c.l.b16 %v2308
    %v2476 = vunpack.c.h.b16 %v2308
    %v2477 = vunpack.c.l.b16 %v2309
    %v2478 = vunpack.c.h.b16 %v2309
    %v2479 = vunpack.c.l.b16 %v2310
    %v2480 = vunpack.c.h.b16 %v2310
    %v2481 = vunpack.c.l.b16 %v2311
    %v2482 = vunpack.c.h.b16 %v2311
    %v2483 = vunpack.c.l.b16 %v2312
    %v2484 = vunpack.c.h.b16 %v2312
    %v2485 = vunpack.c.l.b16 %v2313
    %v2486 = vunpack.c.h.b16 %v2313
    %v2487 = vunpack.c.l.b16 %v2314
    %v2488 = vunpack.c.h.b16 %v2314
    %v2489 = vunpack.c.l.b16 %v2315
    %v2490 = vunpack.c.h.b16 %v2315
    %v2491 = vunpack.c.l.b16 %v2316
    %v2492 = vunpack.c.h.b16 %v2316
    %v2493 = vunpack.c.l.b16 %v2317
    %v2494 = vunpack.c.h.b16 %v2317
    %v2495 = vunpack.c.l.b16 %v2318
    %v2496 = vunpack.c.h.b16 %v2318
    %v2497 = vunpack.c.l.b16 %v2319
    %v2498 = vunpack.c.h.b16 %v2319
    %v2499 = vunpack.c.l.b16 %v2320
    %v2500 = vunpack.c.h.b16 %v2320
    %v2501 = vunpack.c.l.b16 %v2321
    %v2502 = vunpack.c.h.b16 %v2321
    %v2503 = vunpack.c.l.b16 %v2322
    %v2504 = vunpack.c.h.b16 %v2322
    %v2505 = vunpack.c.l.b16 %v2323
    %v2506 = vunpack.c.h.b16 %v2323
    %v2507 = vunpack.c.l.b16 %v2324
    %v2508 = vunpack.c.h.b16 %v2324
    %v2509 = vunpack.c.l.b16 %v2325
    %v2510 = vunpack.c.h.b16 %v2325
    %v2511 = vunpack.c.l.b16 %v2326
    %v2512 = vunpack.c.h.b16 %v2326
    %v2513 = vunpack.c.l.b16 %v2327
    %v2514 = vunpack.c.h.b16 %v2327
    %v2515 = vunpack.c.l.b16 %v2328
    %v2516 = vunpack.c.h.b16 %v2328
    %v2517 = vunpack.c.l.b16 %v2329
    %v2518 = vunpack.c.h.b16 %v2329
    %v2519 = vunpack.c.l.b16 %v2330
    %v2520 = vunpack.c.h.b16 %v2330
    %v2521 = vunpack.c.l.b16 %v2331
    %v2522 = vunpack.c.h.b16 %v2331
    %v2523 = vunpack.c.l.b16 %v2332
    %v2524 = vunpack.c.h.b16 %v2332
    %v2525 = vunpack.c.l.b16 %v2333
    %v2526 = vunpack.c.h.b16 %v2333
    %v2527 = vunpack.c.l.b16 %v2334
    %v2528 = vunpack.c.h.b16 %v2334
    %v2529 = vunpack.c.l.b16 %v2335
    %v2530 = vunpack.c.h.b16 %v2335
    %v2531 = vunpack.c.l.b16 %v2336
    %v2532 = vunpack.c.h.b16 %v2336
    %v2533 = vunpack.c.l.b16 %v2337
    %v2534 = vunpack.c.h.b16 %v2337
    %v2535 = vunpack.c.l.b16 %v2338
    %v2536 = vunpack.c.h.b16 %v2338
    %v2537 = vunpack.c.l.b16 %v2339
    %v2538 = vunpack.c.h.b16 %v2339
    %v2539 = vunpack.c.l.b16 %v2340
    %v2540 = vunpack.c.h.b16 %v2340
    %v2541 = vunpack.c.l.b16 %v2341
    %v2542 = vunpack.c.h.b16 %v2341
    %v2543 = vunpack.c.l.b16 %v2342
    %v2544 = vunpack.c.h.b16 %v2342
    %v2545 = vunpack.c.l.b16 %v2343
    %v2546 = vunpack.c.h.b16 %v2343
    %v2547 = vpack.c.b16 %v2421, %v2419
    %v2548 = vpack.c.b16 %v2422, %v2420
    %v2549 = vpack.c.b16 %v2425, %v2423
    %v2550 = vpack.c.b16 %v2426, %v2424
    %v2551 = vpack.c.b16 %v2429, %v2427
    %v2552 = vpack.c.b16 %v2430, %v2428
    %v2553 = vpack.c.b16 %v2433, %v2431
    %v2554 = vpack.c.b16 %v2434, %v2432
    %v2555 = vpack.c.b16 %v2437, %v2435
    %v2556 = vpack.c.b16 %v2438, %v2436
    %v2557 = vpack.c.b16 %v2441, %v2439
    %v2558 = vpack.c.b16 %v2442, %v2440
    %v2559 = vpack.c.b16 %v2445, %v2443
    %v2560 = vpack.c.b16 %v2446, %v2444
    %v2561 = vpack.c.b16 %v2449, %v2447
    %v2562 = vpack.c.b16 %v2450, %v2448
    %v2563 = vpack.c.b16 %v2453, %v2451
    %v2564 = vpack.c.b16 %v2454, %v2452
    %v2565 = vpack.c.b16 %v2457, %v2455
    %v2566 = vpack.c.b16 %v2458, %v2456
    %v2567 = vpack.c.b16 %v2461, %v2459
    %v2568 = vpack.c.b16 %v2462, %v2460
    %v2569 = vpack.c.b16 %v2465, %v2463
    %v2570 = vpack.c.b16 %v2466, %v2464
    %v2571 = vpack.c.b16 %v2469, %v2467
    %v2572 = vpack.c.b16 %v2470, %v2468
    %v2573 = vpack.c.b16 %v2473, %v2471
    %v2574 = vpack.c.b16 %v2474, %v2472
    %v2575 = vpack.c.b16 %v2477, %v2475
    %v2576 = vpack.c.b16 %v2478, %v2476
    %v2577 = vpack.c.b16 %v2481, %v2479
    %v2578 = vpack.c.b16 %v2482, %v2480
    %v2579 = vpack.c.b16 %v2485, %v2483
    %v2580 = vpack.c.b16 %v2486, %v2484
    %v2581 = vpack.c.b16 %v2489, %v2487
    %v2582 = vpack.c.b16 %v2490, %v2488
    %v2583 = vpack.c.b16 %v2493, %v2491
    %v2584 = vpack.c.b16 %v2494, %v2492
    %v2585 = vpack.c.b16 %v2497, %v2495
    %v2586 = vpack.c.b16 %v2498, %v2496
    %v2587 = vpack.c.b16 %v2501, %v2499
    %v2588 = vpack.c.b16 %v2502, %v2500
    %v2589 = vpack.c.b16 %v2505, %v2503
    %v2590 = vpack.c.b16 %v2506, %v2504
    %v2591 = vpack.c.b16 %v2509, %v2507
    %v2592 = vpack.c.b16 %v2510, %v2508
    %v2593 = vpack.c.b16 %v2513, %v2511
    %v2594 = vpack.c.b16 %v2514, %v2512
    %v2595 = vpack.c.b16 %v2517, %v2515
    %v2596 = vpack.c.b16 %v2518, %v2516
    %v2597 = vpack.c.b16 %v2521, %v2519
    %v2598 = vpack.c.b16 %v2522, %v2520
    %v2599 = vpack.c.b16 %v2525, %v2523
    %v2600 = vpack.c.b16 %v2526, %v2524
    %v2601 = vpack.c.b16 %v2529, %v2527
    %v2602 = vpack.c.b16 %v2530, %v2528
    %v2603 = vpack.c.b16 %v2533, %v2531
    %v2604 = vpack.c.b16 %v2534, %v2532
    %v2605 = vpack.c.b16 %v2537, %v2535
    %v2606 = vpack.c.b16 %v2538, %v2536
    %v2607 = vpack.c.b16 %v2541, %v2539
    %v2608 = vpack.c.b16 %v2542, %v2540
    %v2609 = vpack.c.b16 %v2545, %v2543
    %v2610 = vpack.c.b16 %v2546, %v2544
    %2675 = vmatprep.subr.bf16.mxu0 %v2548
    %2676 = vmatpush1.bf16.msra.mxu0 %v2547
    %2677 = vmatprep.subr.bf16.mxu0 %v2550
    %2678 = vmatpush1.bf16.msra.mxu0 %v2549
    %2679 = vmatprep.subr.bf16.mxu0 %v2552
    %2680 = vmatpush1.bf16.msra.mxu0 %v2551
    %2681 = vmatprep.subr.bf16.mxu0 %v2554
    %2682 = vmatpush1.bf16.msra.mxu0 %v2553
    %2683 = vmatprep.subr.bf16.mxu0 %v2556
    %2684 = vmatpush1.bf16.msra.mxu0 %v2555
    %2685 = vmatprep.subr.bf16.mxu0 %v2558
    %2686 = vmatpush1.bf16.msra.mxu0 %v2557
    %2687 = vmatprep.subr.bf16.mxu0 %v2560
    %2688 = vmatpush1.bf16.msra.mxu0 %v2559
    %2689 = vmatprep.subr.bf16.mxu0 %v2562
    %2690 = vmatpush1.bf16.msra.mxu0 %v2561
    %2691 = vmatprep.subr.bf16.mxu0 %v2564
    %2692 = vmatpush1.bf16.msra.mxu0 %v2563
    %2693 = vmatprep.subr.bf16.mxu0 %v2566
    %2694 = vmatpush1.bf16.msra.mxu0 %v2565
    %2695 = vmatprep.subr.bf16.mxu0 %v2568
    %2696 = vmatpush1.bf16.msra.mxu0 %v2567
    %2697 = vmatprep.subr.bf16.mxu0 %v2570
    %2698 = vmatpush1.bf16.msra.mxu0 %v2569
    %2699 = vmatprep.subr.bf16.mxu0 %v2572
    %2700 = vmatpush1.bf16.msra.mxu0 %v2571
    %2701 = vmatprep.subr.bf16.mxu0 %v2574
    %2702 = vmatpush1.bf16.msra.mxu0 %v2573
    %2703 = vmatprep.subr.bf16.mxu0 %v2576
    %2704 = vmatpush1.bf16.msra.mxu0 %v2575
    %2705 = vmatprep.subr.bf16.mxu0 %v2578
    %2706 = vmatpush1.bf16.msra.mxu0 %v2577
    %2707 = vmatprep.mubr.bf16.mxu0 %v2277
    %2708 = vmatmul.mubr.bf16.gmra.mrb[0].mxu0 %v2276
    %v2709 = vpop.f32.mrb[0].mxu0
    %v2710 = vadd.f32 %v2348, %v2709
    %v2711 = vpop.f32.mrb[0].mxu0
    %v2712 = vadd.f32 %v2352, %v2711
    %v2713 = vpop.f32.mrb[0].mxu0
    %v2714 = vpop.f32.mrb[0].mxu0
    %2715 = vdwg.mxu0
    %2716 = vmatprep.subr.bf16.mxu0 %v2580
    %2717 = vmatpush1.bf16.msra.mxu0 %v2579
    %2718 = vmatprep.subr.bf16.mxu0 %v2582
    %2719 = vmatpush1.bf16.msra.mxu0 %v2581
    %2720 = vmatprep.subr.bf16.mxu0 %v2584
    %2721 = vmatpush1.bf16.msra.mxu0 %v2583
    %2722 = vmatprep.subr.bf16.mxu0 %v2586
    %2723 = vmatpush1.bf16.msra.mxu0 %v2585
    %2724 = vmatprep.subr.bf16.mxu0 %v2588
    %2725 = vmatpush1.bf16.msra.mxu0 %v2587
    %2726 = vmatprep.subr.bf16.mxu0 %v2590
    %2727 = vmatpush1.bf16.msra.mxu0 %v2589
    %2728 = vmatprep.subr.bf16.mxu0 %v2592
    %2729 = vmatpush1.bf16.msra.mxu0 %v2591
    %2730 = vmatprep.subr.bf16.mxu0 %v2594
    %2731 = vmatpush1.bf16.msra.mxu0 %v2593
    %2732 = vmatprep.subr.bf16.mxu0 %v2596
    %2733 = vmatpush1.bf16.msra.mxu0 %v2595
    %2734 = vmatprep.subr.bf16.mxu0 %v2598
    %2735 = vmatpush1.bf16.msra.mxu0 %v2597
    %2736 = vmatprep.subr.bf16.mxu0 %v2600
    %2737 = vmatpush1.bf16.msra.mxu0 %v2599
    %2738 = vmatprep.subr.bf16.mxu0 %v2602
    %2739 = vmatpush1.bf16.msra.mxu0 %v2601
    %2740 = vmatprep.subr.bf16.mxu0 %v2604
    %2741 = vmatpush1.bf16.msra.mxu0 %v2603
    %2742 = vmatprep.subr.bf16.mxu0 %v2606
    %2743 = vmatpush1.bf16.msra.mxu0 %v2605
    %2744 = vmatprep.subr.bf16.mxu0 %v2608
    %2745 = vmatpush1.bf16.msra.mxu0 %v2607
    %2746 = vmatprep.subr.bf16.mxu0 %v2610
    %2747 = vmatpush1.bf16.msra.mxu0 %v2609
    %2748 = vmatprep.mubr.bf16.mxu0 %v2279
    %2749 = vmatmul.mubr.bf16.gmra.mrb[0].mxu0 %v2278
    %v2750 = vpop.f32.mrb[0].mxu0
    %v2751 = vadd.f32 %v2710, %v2750
    %v2752 = vpop.f32.mrb[0].mxu0
    %v2753 = vadd.f32 %v2712, %v2752
    %v2754 = vpop.f32.mrb[0].mxu0
    %v2755 = vpop.f32.mrb[0].mxu0
    %2756 = vdwg.mxu0
    %v2757 = vadd.f32 %v2751, %v2753
    %2758 = vadd.xlane.f32.xlu0 %v2757
    %v2759 = vpop.xlane.xlu0 %2758
    %v2760 = vmul.f32 %v2751, %v2751
    %v2761 = vmul.f32 %v2753, %v2753
    %v2762 = vadd.f32 %v2760, %v2761
    %2763 = vadd.xlane.f32.xlu0 %v2762
    %v2764 = vpop.xlane.xlu0 %2763
    %v2765 = vmul.f32 %v2759, 0.00390625
    %v2766 = vmul.f32 %v2764, 0.00390625
    %v2767 = vmul.f32 %v2765, %v2765
    %v2768 = vsub.f32 %v2766, %v2767
    %v2769 = vsub.f32 %v2751, %v2765
    %v2770 = vsub.f32 %v2753, %v2765
    %v2771 = vadd.f32 %v2768, 1e-05
    %v2772 = vrsqrt.pop %v2771
    %v2773 = vmul.f32 %v2769, %v2772
    %v2774 = vmul.f32 %v2770, %v2772
    %v2776 = vlaneseq
    %v2777 = vshrl.u32 %v2776, 7
    %v2778 = vsub.s32 0, %v2777
    %v2779 = vrot.slane %v87, %v2778
    %v2780 = vlaneseq
    %v2781 = vshrl.u32 %v2780, 7
    %v2782 = vsub.s32 1, %v2781
    %v2783 = vrot.slane %v87, %v2782
    %v2786 = vmul.f32 %v2773, %v2779
    %v2787 = vmul.f32 %v2774, %v2783
    %v2789 = vlaneseq
    %v2790 = vshrl.u32 %v2789, 7
    %v2791 = vsub.s32 0, %v2790
    %v2792 = vrot.slane %v89, %v2791
    %v2793 = vlaneseq
    %v2794 = vshrl.u32 %v2793, 7
    %v2795 = vsub.s32 1, %v2794
    %v2796 = vrot.slane %v89, %v2795
    %v2799 = vadd.f32 %v2786, %v2792
    %v2800 = vadd.f32 %v2787, %v2796
    %v2801 = vtanh.pop %v2799
    %v2802 = vtanh.pop %v2800
    %v2803 = vld [vmem:[%s7] sm:$0xff]
    %v2804 = vld [vmem:[%s7 + $0x8] sm:$0xff]
    %v2805 = vld [vmem:[%s7 + $0x10] sm:$0xff]
    %v2806 = vld [vmem:[%s7 + $0x18] sm:$0xff]
    %v2807 = vld [vmem:[%s7 + $0x20] sm:$0xff]
    %v2808 = vld [vmem:[%s7 + $0x28] sm:$0xff]
    %v2809 = vld [vmem:[%s7 + $0x30] sm:$0xff]
    %v2810 = vld [vmem:[%s7 + $0x38] sm:$0xff]
    %v2811 = vld [vmem:[%s7 + $0x40] sm:$0xff]
    %v2812 = vld [vmem:[%s7 + $0x48] sm:$0xff]
    %v2813 = vld [vmem:[%s7 + $0x50] sm:$0xff]
    %v2814 = vld [vmem:[%s7 + $0x58] sm:$0xff]
    %v2815 = vld [vmem:[%s7 + $0x60] sm:$0xff]
    %v2816 = vld [vmem:[%s7 + $0x68] sm:$0xff]
    %v2817 = vld [vmem:[%s7 + $0x70] sm:$0xff]
    %v2818 = vld [vmem:[%s7 + $0x78] sm:$0xff]
    %v2819 = vld [vmem:[%s7 + $0x80] sm:$0xff]
    %v2820 = vld [vmem:[%s7 + $0x88] sm:$0xff]
    %v2821 = vld [vmem:[%s7 + $0x90] sm:$0xff]
    %v2822 = vld [vmem:[%s7 + $0x98] sm:$0xff]
    %v2823 = vld [vmem:[%s7 + $0xa0] sm:$0xff]
    %v2824 = vld [vmem:[%s7 + $0xa8] sm:$0xff]
    %v2825 = vld [vmem:[%s7 + $0xb0] sm:$0xff]
    %v2826 = vld [vmem:[%s7 + $0xb8] sm:$0xff]
    %v2827 = vld [vmem:[%s7 + $0xc0] sm:$0xff]
    %v2828 = vld [vmem:[%s7 + $0xc8] sm:$0xff]
    %v2829 = vld [vmem:[%s7 + $0xd0] sm:$0xff]
    %v2830 = vld [vmem:[%s7 + $0xd8] sm:$0xff]
    %v2831 = vld [vmem:[%s7 + $0xe0] sm:$0xff]
    %v2832 = vld [vmem:[%s7 + $0xe8] sm:$0xff]
    %v2833 = vld [vmem:[%s7 + $0xf0] sm:$0xff]
    %v2834 = vld [vmem:[%s7 + $0xf8] sm:$0xff]
    %2835 = vmatprep.subr.mxu0 0.0
    %2836 = vmatpush1.msra.mxu0 %v2803
    %2837 = vmatprep.subr.mxu0 0.0
    %2838 = vmatpush1.msra.mxu0 %v2804
    %2839 = vmatprep.subr.mxu0 0.0
    %2840 = vmatpush1.msra.mxu0 %v2805
    %2841 = vmatprep.subr.mxu0 0.0
    %2842 = vmatpush1.msra.mxu0 %v2806
    %2843 = vmatprep.subr.mxu0 0.0
    %2844 = vmatpush1.msra.mxu0 %v2807
    %2845 = vmatprep.subr.mxu0 0.0
    %2846 = vmatpush1.msra.mxu0 %v2808
    %2847 = vmatprep.subr.mxu0 0.0
    %2848 = vmatpush1.msra.mxu0 %v2809
    %2849 = vmatprep.subr.mxu0 0.0
    %2850 = vmatpush1.msra.mxu0 %v2810
    %2851 = vmatprep.subr.mxu0 0.0
    %2852 = vmatpush1.msra.mxu0 %v2811
    %2853 = vmatprep.subr.mxu0 0.0
    %2854 = vmatpush1.msra.mxu0 %v2812
    %2855 = vmatprep.subr.mxu0 0.0
    %2856 = vmatpush1.msra.mxu0 %v2813
    %2857 = vmatprep.subr.mxu0 0.0
    %2858 = vmatpush1.msra.mxu0 %v2814
    %2859 = vmatprep.subr.mxu0 0.0
    %2860 = vmatpush1.msra.mxu0 %v2815
    %2861 = vmatprep.subr.mxu0 0.0
    %2862 = vmatpush1.msra.mxu0 %v2816
    %2863 = vmatprep.subr.mxu0 0.0
    %2864 = vmatpush1.msra.mxu0 %v2817
    %2865 = vmatprep.subr.mxu0 0.0
    %2866 = vmatpush1.msra.mxu0 %v2818
    %2867 = vmatprep.subr.mxu0 0.0
    %2868 = vmatpush1.msra.mxu0 %v2819
    %2869 = vmatprep.subr.mxu0 0.0
    %2870 = vmatpush1.msra.mxu0 %v2820
    %2871 = vmatprep.subr.mxu0 0.0
    %2872 = vmatpush1.msra.mxu0 %v2821
    %2873 = vmatprep.subr.mxu0 0.0
    %2874 = vmatpush1.msra.mxu0 %v2822
    %2875 = vmatprep.subr.mxu0 0.0
    %2876 = vmatpush1.msra.mxu0 %v2823
    %2877 = vmatprep.subr.mxu0 0.0
    %2878 = vmatpush1.msra.mxu0 %v2824
    %2879 = vmatprep.subr.mxu0 0.0
    %2880 = vmatpush1.msra.mxu0 %v2825
    %2881 = vmatprep.subr.mxu0 0.0
    %2882 = vmatpush1.msra.mxu0 %v2826
    %2883 = vmatprep.subr.mxu0 0.0
    %2884 = vmatpush1.msra.mxu0 %v2827
    %2885 = vmatprep.subr.mxu0 0.0
    %2886 = vmatpush1.msra.mxu0 %v2828
    %2887 = vmatprep.subr.mxu0 0.0
    %2888 = vmatpush1.msra.mxu0 %v2829
    %2889 = vmatprep.subr.mxu0 0.0
    %2890 = vmatpush1.msra.mxu0 %v2830
    %2891 = vmatprep.subr.mxu0 0.0
    %2892 = vmatpush1.msra.mxu0 %v2831
    %2893 = vmatprep.subr.mxu0 0.0
    %2894 = vmatpush1.msra.mxu0 %v2832
    %2895 = vmatprep.subr.mxu0 0.0
    %2896 = vmatpush1.msra.mxu0 %v2833
    %2897 = vmatprep.subr.mxu0 0.0
    %2898 = vmatpush1.msra.mxu0 %v2834
    %2899 = vmatprep.mubr.f32.mxu0 %v2802
    %2900 = vmatmul.mubr.f32.gmra.mrb[0].mxu0 %v2801
    %v2901 = vpop.f32.mrb[0].mxu0
    %v2902 = vadd.f32 %v90, %v2901
    %v2903 = vpop.f32.mrb[0].mxu0
    %2904 = vdwg.mxu0
    %2905 = vst [vmem:[#allocation8] sm:$0xff] %v2902
    // Predicated region
    $region50: #{tpu_custom_call.1} parent=1 // pred_check
      _
    $region51: #{tpu_custom_call.1} parent=1 // pred_check_branch
      %2907 = sbr.rel (0) target = $region53
    $region52: #{tpu_custom_call.1} parent=1 // pred_region
      %s2909 = ssub.s32 128, 128
      %2910 = vsyncadd [#allocation4], %s2909
      %s2912 = sshll.u32 [#allocation8], 4
      %s2913 = int_to_ptr.vmem [resolvable:$true] %s2912
      %2915 = dma.vmem_to_hbm [thread:$0]  %s2913, 128, %s9, [#allocation4]
    $region53: #{tpu_custom_call.1} parent=1 // pred_fallthru
      _
    // Predicated region
    $region54: #{tpu_custom_call.1} parent=1 // pred_check
      _
    $region55: #{tpu_custom_call.1} parent=1 // pred_check_branch
      %2917 = sbr.rel (0) target = $region57
    $region56: #{tpu_custom_call.1} parent=1 // pred_region
      %2918 = dma.done [#allocation4], 128
    $region57: #{tpu_custom_call.1} parent=1 // pred_fallthru
      _
    %2919 = vsyncpa [#allocation3], 1
    %2920 = vsyncpa [#allocation6], 1
    %2921 = vsyncpa [#allocation4], 1

</llo_original>
